<compile_context>
chip_gen: v6e
topology: v6e:2x2x1
jax: 0.10.0
libtpu: 0.0.40
codegen_flags: <defaults>
</compile_context>

<pallas_src>
import jax
import jax.numpy as jnp
from jax.experimental import pallas as pl
from jax.experimental.pallas import tpu as pltpu

# ---- model hyper-parameters (small, consistent with the module) ----
VOCAB = 16          # embedding_dim  (num embeddings)
D = 32              # input_size     (embedding vector dim)
H = 32              # hidden_size
O = 8               # output_size
L = 2               # num_layers (forward uses hidden[-2] and hidden[-1] => needs >= 2)
B = 2               # batch (per request)
T = 8               # sequence length
R = 8               # number of requests (grid axis; amortizes launch + weight DMA)


def lstm_classifier_kernel(onehot_ref, tg0_ref, wrec_ref, b1_ref, fcw_ref, fcb_ref,
                           out_ref):
    """One request: one-hot tokens -> logits, entirely in VMEM.

    onehot_ref: (1, T*B, VOCAB) f32 one-hot tokens, row order (t, b)
    tg0_ref   : (VOCAB, 4H)     fused  emb @ W_ih0^T + (b_ih0 + b_hh0)
    wrec_ref  : (2H, 8H)        fused recurrent weights [[Whh0^T | Wih1^T],[0 | Whh1^T]]
    b1_ref    : (1, 4H)         layer-1 combined gate bias
    fcw_ref   : (2H, O)         fused fc1·fc2 weight;  fcb_ref: (1, O) fused bias
    out_ref   : (1, B, O)
    """
    f32 = jnp.float32

    # Hoist weight / bias loads out of the (unrolled) recurrence.
    tg0 = tg0_ref[...]            # (VOCAB, 4H)
    wrec = wrec_ref[...]          # (2H, 8H)
    b1 = b1_ref[...]              # (1, 4H)

    # ---- token gather, done ONCE, off the recurrence: one small MXU push ----
    # (T*B, VOCAB) @ (VOCAB, 4H) -> (T*B, 4H); layer-0 bias already folded in.
    xg_all = jnp.dot(onehot_ref[0], tg0, preferred_element_type=f32)

    def lstm_cell(gates, c):
        # 3 EUP pushes per cell: sigmoid(4H), tanh(g), tanh(c_new).
        sig = jax.nn.sigmoid(gates)                       # (B, 4H)
        i_g = sig[:, 0:H]
        f_g = sig[:, H:2 * H]
        o_g = sig[:, 3 * H:4 * H]
        g_g = jnp.tanh(gates[:, 2 * H:3 * H])
        c_new = f_g * c + i_g * g_g
        h_new = o_g * jnp.tanh(c_new)
        return h_new, c_new

    zeros_h = jnp.zeros((B, H), f32)

    # ---- wavefront step 0 (prologue): layer-0 step 0 only; h0_{-1} = 0 ----
    h0, c0 = lstm_cell(xg_all[0:B, :], c=zeros_h)
    h1, c1 = zeros_h, zeros_h

    # ---- wavefront steps 1..T-1: layer-0 step s and layer-1 step s-1 ----
    # Single fused 256-wide matmul per step; fully unrolled (T static).
    for s in range(1, T):
        hh = jnp.concatenate([h0, h1], axis=1)            # (B, 2H) lane concat (XLU)
        g = jnp.dot(hh, wrec, preferred_element_type=f32)  # (B, 8H): one MXU push
        g0 = xg_all[s * B:(s + 1) * B, :] + g[:, 0:4 * H]  # layer-0 gates, step s
        g1 = g[:, 4 * H:8 * H] + b1                        # layer-1 gates, step s-1
        new_h0, new_c0 = lstm_cell(g0, c0)
        h1, c1 = lstm_cell(g1, c1)
        h0, c0 = new_h0, new_c0

    # ---- epilogue: layer-1 step T-1 ----
    hh = jnp.concatenate([h0, h1], axis=1)
    g1 = jnp.dot(hh, wrec[:, 4 * H:8 * H], preferred_element_type=f32) + b1
    h1, c1 = lstm_cell(g1, c1)

    # torch.cat((hidden[-2], hidden[-1]), dim=1) -> fc1 -> fc2 (fused; dropouts identity).
    hidden = jnp.concatenate([h0, h1], axis=1)             # (B, 2H)
    out_ref[0] = (jnp.dot(hidden, fcw_ref[...], preferred_element_type=f32)
                  + fcb_ref[...])


def init_params(key):
    """PyTorch-layout parameters (used by the pure-JAX reference)."""
    ks = jax.random.split(key, 14)
    s = 0.1
    p = {"emb": jax.random.normal(ks[0], (VOCAB, D), jnp.float32) * s,
         "w_ih": [], "w_hh": [], "b_ih": [], "b_hh": []}
    for l in range(L):
        in_dim = D if l == 0 else H
        p["w_ih"].append(jax.random.normal(ks[1 + 4 * l], (4 * H, in_dim), jnp.float32) * s)
        p["w_hh"].append(jax.random.normal(ks[2 + 4 * l], (4 * H, H), jnp.float32) * s)
        p["b_ih"].append(jax.random.normal(ks[3 + 4 * l], (4 * H,), jnp.float32) * s)
        p["b_hh"].append(jax.random.normal(ks[4 + 4 * l], (4 * H,), jnp.float32) * s)
    p["fc1_w"] = jax.random.normal(ks[9], (H, 2 * H), jnp.float32) * s
    p["fc1_b"] = jax.random.normal(ks[10], (H,), jnp.float32) * s
    p["fc2_w"] = jax.random.normal(ks[11], (O, H), jnp.float32) * s
    p["fc2_b"] = jax.random.normal(ks[12], (O,), jnp.float32) * s
    return p


def make_kernel_params(p):
    """Offline fusions / pre-transposes consumed by the kernel (exact linear algebra)."""
    kp = {}
    # Embedding gather + layer-0 input projection + layer-0 gate bias, dense (VOCAB, 4H).
    kp["tok_gates0"] = (p["emb"] @ p["w_ih"][0].T
                        + (p["b_ih"][0] + p["b_hh"][0])[None, :])              # (16, 128)
    # Fused recurrent block:  rows = [h0 | h1],  cols = [layer-0 gates | layer-1 gates]
    #   [[ Whh0^T , Wih1^T ],
    #    [   0    , Whh1^T ]]                                                   (2H, 8H)
    top = jnp.concatenate([p["w_hh"][0].T, p["w_ih"][1].T], axis=1)             # (H, 8H)
    bot = jnp.concatenate([jnp.zeros((H, 4 * H), jnp.float32), p["w_hh"][1].T], axis=1)
    kp["w_rec"] = jnp.concatenate([top, bot], axis=0)                           # (64, 256)
    kp["b1"] = (p["b_ih"][1] + p["b_hh"][1])[None, :]                           # (1, 4H)
    # fc1 and fc2 compose linearly (no activation between them in the module).
    kp["fc_wT"] = p["fc1_w"].T @ p["fc2_w"].T                                   # (2H, O)
    kp["fc_b"] = p["fc1_b"][None, :] @ p["fc2_w"].T + p["fc2_b"][None, :]       # (1, O)
    return kp


def recurrent_classifier_forward(tokens, kp):
    """tokens: (R, B, T) int32 -> logits (R, B, O).

    Weights use constant index_maps (VMEM-resident across the request grid);
    only the per-request one-hot tokens and output are tiled.
    """
    nreq = tokens.shape[0]
    # One-hot in (t, b) row order so the kernel's step-s slice is xg_all[s*B:(s+1)*B].
    # Out-of-range token ids produce an all-zero row (safe: no raw VMEM indexing).
    tok_tb = jnp.transpose(tokens, (0, 2, 1)).reshape(nreq, T * B)
    onehot = (tok_tb[:, :, None]
              == jnp.arange(VOCAB, dtype=jnp.int32)[None, None, :]).astype(jnp.float32)

    const2 = lambda r: (0, 0)
    return pl.pallas_call(
        lstm_classifier_kernel,
        out_shape=jax.ShapeDtypeStruct((nreq, B, O), jnp.float32),
        grid=(nreq,),
        in_specs=[
            pl.BlockSpec((1, T * B, VOCAB), lambda r: (r, 0, 0)),   # per-request tokens
            pl.BlockSpec((VOCAB, 4 * H), const2),                   # weights: constant
            pl.BlockSpec((2 * H, 8 * H), const2),
            pl.BlockSpec((1, 4 * H), const2),
            pl.BlockSpec((2 * H, O), const2),
            pl.BlockSpec((1, O), const2),
        ],
        out_specs=pl.BlockSpec((1, B, O), lambda r: (r, 0, 0)),
        compiler_params=pltpu.CompilerParams(
            dimension_semantics=("parallel",)),
    )(onehot, kp["tok_gates0"], kp["w_rec"], kp["b1"], kp["fc_wT"], kp["fc_b"])


def reference_forward(tokens, p):
    """Pure-JAX reference matching PyTorch semantics (eval mode, unfused weights).

    tokens: (B, T) int32.
    """
    x_seq = jnp.take(p["emb"], tokens, axis=0)                  # (B, T, D)
    finals = []
    for l in range(L):
        h = jnp.zeros((B, H), jnp.float32)
        c = jnp.zeros((B, H), jnp.float32)
        outs = []
        for t in range(T):
            gates = (x_seq[:, t, :] @ p["w_ih"][l].T + h @ p["w_hh"][l].T
                     + p["b_ih"][l] + p["b_hh"][l])
            i_g = jax.nn.sigmoid(gates[:, 0:H])
            f_g = jax.nn.sigmoid(gates[:, H:2 * H])
            g_g = jnp.tanh(gates[:, 2 * H:3 * H])
            o_g = jax.nn.sigmoid(gates[:, 3 * H:4 * H])
            c = f_g * c + i_g * g_g
            h = o_g * jnp.tanh(c)
            outs.append(h)
        x_seq = jnp.stack(outs, axis=1)
        finals.append(h)
    hidden = jnp.concatenate([finals[-2], finals[-1]], axis=1)
    z = hidden @ p["fc1_w"].T + p["fc1_b"]
    return z @ p["fc2_w"].T + p["fc2_b"]


if __name__ == "__main__":
    key = jax.random.PRNGKey(0)
    k_tok, k_par = jax.random.split(key)
    params = init_params(k_par)
    kparams = make_kernel_params(params)
    tokens = jax.random.randint(k_tok, (R, B, T), 0, VOCAB, dtype=jnp.int32)

    out = jax.block_until_ready(recurrent_classifier_forward(tokens, kparams))

    ref = jnp.stack([reference_forward(tokens[r], params) for r in range(R)], axis=0)
    ref = jax.block_until_ready(ref)

    assert out.shape == (R, B, O)
    # Offline fusions reorder f32 rounding vs the unfused reference; keep 2e-3.
    assert jnp.allclose(out, ref, atol=2e-3, rtol=2e-3), (out, ref)
    print("KERNEL_OK")
</pallas_src>

<mosaic_0001>
module attributes {stable_mosaic.version = 11 : i64} {
  func.func @lstm_classifier_kernel(%arg0: i32, %arg1: memref<1x16x16xf32, #tpu.memory_space<vmem>>, %arg2: memref<16x128xf32, #tpu.memory_space<vmem>>, %arg3: memref<64x256xf32, #tpu.memory_space<vmem>>, %arg4: memref<1x128xf32, #tpu.memory_space<vmem>>, %arg5: memref<64x8xf32, #tpu.memory_space<vmem>>, %arg6: memref<1x8xf32, #tpu.memory_space<vmem>>, %arg7: memref<1x2x8xf32, #tpu.memory_space<vmem>>) attributes {dimension_semantics = [#tpu.dimension_semantics<parallel>], iteration_bounds = array<i64: 8>, scalar_prefetch = 0 : i64, scratch_operands = 0 : i64, tpu.core_type = #tpu.core_type<tc>, window_params = [{transform_indices = @transform_0, window_bounds = array<i64: 1, 16, 16>}, {pipeline_mode = #tpu.pipeline_mode<synchronous>, transform_indices = @transform_1, window_bounds = array<i64: 16, 128>}, {pipeline_mode = #tpu.pipeline_mode<synchronous>, transform_indices = @transform_2, window_bounds = array<i64: 64, 256>}, {pipeline_mode = #tpu.pipeline_mode<synchronous>, transform_indices = @transform_3, window_bounds = array<i64: 1, 128>}, {pipeline_mode = #tpu.pipeline_mode<synchronous>, transform_indices = @transform_4, window_bounds = array<i64: 64, 8>}, {pipeline_mode = #tpu.pipeline_mode<synchronous>, transform_indices = @transform_5, window_bounds = array<i64: 1, 8>}, {transform_indices = @transform_6, window_bounds = array<i64: 1, 2, 8>}]} {
    %c0 = arith.constant 0 : index
    %c0_0 = arith.constant 0 : index
    %0 = vector.load %arg2[%c0, %c0_0] : memref<16x128xf32, #tpu.memory_space<vmem>>, vector<16x128xf32>
    %c0_1 = arith.constant 0 : index
    %c0_2 = arith.constant 0 : index
    %1 = vector.load %arg3[%c0_1, %c0_2] : memref<64x256xf32, #tpu.memory_space<vmem>>, vector<64x256xf32>
    %c0_3 = arith.constant 0 : index
    %c0_4 = arith.constant 0 : index
    %2 = vector.load %arg4[%c0_3, %c0_4] : memref<1x128xf32, #tpu.memory_space<vmem>>, vector<1x128xf32>
    %c0_5 = arith.constant 0 : index
    %c0_6 = arith.constant 0 : index
    %c0_7 = arith.constant 0 : index
    %3 = vector.load %arg1[%c0_5, %c0_6, %c0_7] : memref<1x16x16xf32, #tpu.memory_space<vmem>>, vector<1x16x16xf32>
    %4 = vector.shape_cast %3 : vector<1x16x16xf32> to vector<16x16xf32>
    %cst = arith.constant dense<0.000000e+00> : vector<16x128xf32>
    %5 = tpu.matmul %4, %0, %cst {dimension_numbers = #tpu.dot_dimension_numbers<[1], [0], [0], [1], [0, 0, 1, 1], [], []>} : vector<16x16xf32>, vector<16x128xf32>, vector<16x128xf32> -> vector<16x128xf32>
    %cst_8 = arith.constant 0.000000e+00 : f32
    %6 = vector.broadcast %cst_8 : f32 to vector<2x32xf32>
    %7 = vector.extract_strided_slice %5 {offsets = [0, 0], sizes = [2, 128], strides = [1, 1]} : vector<16x128xf32> to vector<2x128xf32>
    %8 = arith.negf %7 : vector<2x128xf32>
    %9 = math.exp %8 : vector<2x128xf32>
    %cst_9 = arith.constant 1.000000e+00 : f32
    %10 = vector.broadcast %cst_9 : f32 to vector<2x128xf32>
    %11 = arith.addf %10, %9 : vector<2x128xf32>
    %12 = arith.divf %10, %11 : vector<2x128xf32>
    %13 = vector.extract_strided_slice %12 {offsets = [0, 0], sizes = [2, 32], strides = [1, 1]} : vector<2x128xf32> to vector<2x32xf32>
    %14 = vector.extract_strided_slice %12 {offsets = [0, 32], sizes = [2, 32], strides = [1, 1]} : vector<2x128xf32> to vector<2x32xf32>
    %15 = vector.extract_strided_slice %12 {offsets = [0, 96], sizes = [2, 32], strides = [1, 1]} : vector<2x128xf32> to vector<2x32xf32>
    %16 = vector.extract_strided_slice %7 {offsets = [0, 64], sizes = [2, 32], strides = [1, 1]} : vector<2x128xf32> to vector<2x32xf32>
    %17 = math.tanh %16 : vector<2x32xf32>
    %18 = arith.mulf %14, %6 : vector<2x32xf32>
    %19 = arith.mulf %13, %17 : vector<2x32xf32>
    %20 = arith.addf %18, %19 : vector<2x32xf32>
    %21 = math.tanh %20 : vector<2x32xf32>
    %22 = arith.mulf %15, %21 : vector<2x32xf32>
    %23 = tpu.concatenate %22, %6 in 1 : vector<2x32xf32>, vector<2x32xf32> -> vector<2x64xf32>
    %cst_10 = arith.constant dense<0.000000e+00> : vector<2x256xf32>
    %24 = tpu.matmul %23, %1, %cst_10 {dimension_numbers = #tpu.dot_dimension_numbers<[1], [0], [0], [1], [0, 0, 1, 1], [], []>} : vector<2x64xf32>, vector<64x256xf32>, vector<2x256xf32> -> vector<2x256xf32>
    %25 = vector.extract_strided_slice %5 {offsets = [2, 0], sizes = [2, 128], strides = [1, 1]} : vector<16x128xf32> to vector<2x128xf32>
    %26 = vector.extract_strided_slice %24 {offsets = [0, 0], sizes = [2, 128], strides = [1, 1]} : vector<2x256xf32> to vector<2x128xf32>
    %27 = arith.addf %25, %26 : vector<2x128xf32>
    %28 = vector.extract_strided_slice %24 {offsets = [0, 128], sizes = [2, 128], strides = [1, 1]} : vector<2x256xf32> to vector<2x128xf32>
    %29 = vector.broadcast %2 : vector<1x128xf32> to vector<2x128xf32>
    %30 = arith.addf %28, %29 : vector<2x128xf32>
    %31 = arith.negf %27 : vector<2x128xf32>
    %32 = math.exp %31 : vector<2x128xf32>
    %cst_11 = arith.constant 1.000000e+00 : f32
    %33 = vector.broadcast %cst_11 : f32 to vector<2x128xf32>
    %34 = arith.addf %33, %32 : vector<2x128xf32>
    %35 = arith.divf %33, %34 : vector<2x128xf32>
    %36 = vector.extract_strided_slice %35 {offsets = [0, 0], sizes = [2, 32], strides = [1, 1]} : vector<2x128xf32> to vector<2x32xf32>
    %37 = vector.extract_strided_slice %35 {offsets = [0, 32], sizes = [2, 32], strides = [1, 1]} : vector<2x128xf32> to vector<2x32xf32>
    %38 = vector.extract_strided_slice %35 {offsets = [0, 96], sizes = [2, 32], strides = [1, 1]} : vector<2x128xf32> to vector<2x32xf32>
    %39 = vector.extract_strided_slice %27 {offsets = [0, 64], sizes = [2, 32], strides = [1, 1]} : vector<2x128xf32> to vector<2x32xf32>
    %40 = math.tanh %39 : vector<2x32xf32>
    %41 = arith.mulf %37, %20 : vector<2x32xf32>
    %42 = arith.mulf %36, %40 : vector<2x32xf32>
    %43 = arith.addf %41, %42 : vector<2x32xf32>
    %44 = math.tanh %43 : vector<2x32xf32>
    %45 = arith.mulf %38, %44 : vector<2x32xf32>
    %46 = arith.negf %30 : vector<2x128xf32>
    %47 = math.exp %46 : vector<2x128xf32>
    %cst_12 = arith.constant 1.000000e+00 : f32
    %48 = vector.broadcast %cst_12 : f32 to vector<2x128xf32>
    %49 = arith.addf %48, %47 : vector<2x128xf32>
    %50 = arith.divf %48, %49 : vector<2x128xf32>
    %51 = vector.extract_strided_slice %50 {offsets = [0, 0], sizes = [2, 32], strides = [1, 1]} : vector<2x128xf32> to vector<2x32xf32>
    %52 = vector.extract_strided_slice %50 {offsets = [0, 32], sizes = [2, 32], strides = [1, 1]} : vector<2x128xf32> to vector<2x32xf32>
    %53 = vector.extract_strided_slice %50 {offsets = [0, 96], sizes = [2, 32], strides = [1, 1]} : vector<2x128xf32> to vector<2x32xf32>
    %54 = vector.extract_strided_slice %30 {offsets = [0, 64], sizes = [2, 32], strides = [1, 1]} : vector<2x128xf32> to vector<2x32xf32>
    %55 = math.tanh %54 : vector<2x32xf32>
    %56 = arith.mulf %52, %6 : vector<2x32xf32>
    %57 = arith.mulf %51, %55 : vector<2x32xf32>
    %58 = arith.addf %56, %57 : vector<2x32xf32>
    %59 = math.tanh %58 : vector<2x32xf32>
    %60 = arith.mulf %53, %59 : vector<2x32xf32>
    %61 = tpu.concatenate %45, %60 in 1 : vector<2x32xf32>, vector<2x32xf32> -> vector<2x64xf32>
    %cst_13 = arith.constant dense<0.000000e+00> : vector<2x256xf32>
    %62 = tpu.matmul %61, %1, %cst_13 {dimension_numbers = #tpu.dot_dimension_numbers<[1], [0], [0], [1], [0, 0, 1, 1], [], []>} : vector<2x64xf32>, vector<64x256xf32>, vector<2x256xf32> -> vector<2x256xf32>
    %63 = vector.extract_strided_slice %5 {offsets = [4, 0], sizes = [2, 128], strides = [1, 1]} : vector<16x128xf32> to vector<2x128xf32>
    %64 = vector.extract_strided_slice %62 {offsets = [0, 0], sizes = [2, 128], strides = [1, 1]} : vector<2x256xf32> to vector<2x128xf32>
    %65 = arith.addf %63, %64 : vector<2x128xf32>
    %66 = vector.extract_strided_slice %62 {offsets = [0, 128], sizes = [2, 128], strides = [1, 1]} : vector<2x256xf32> to vector<2x128xf32>
    %67 = vector.broadcast %2 : vector<1x128xf32> to vector<2x128xf32>
    %68 = arith.addf %66, %67 : vector<2x128xf32>
    %69 = arith.negf %65 : vector<2x128xf32>
    %70 = math.exp %69 : vector<2x128xf32>
    %cst_14 = arith.constant 1.000000e+00 : f32
    %71 = vector.broadcast %cst_14 : f32 to vector<2x128xf32>
    %72 = arith.addf %71, %70 : vector<2x128xf32>
    %73 = arith.divf %71, %72 : vector<2x128xf32>
    %74 = vector.extract_strided_slice %73 {offsets = [0, 0], sizes = [2, 32], strides = [1, 1]} : vector<2x128xf32> to vector<2x32xf32>
    %75 = vector.extract_strided_slice %73 {offsets = [0, 32], sizes = [2, 32], strides = [1, 1]} : vector<2x128xf32> to vector<2x32xf32>
    %76 = vector.extract_strided_slice %73 {offsets = [0, 96], sizes = [2, 32], strides = [1, 1]} : vector<2x128xf32> to vector<2x32xf32>
    %77 = vector.extract_strided_slice %65 {offsets = [0, 64], sizes = [2, 32], strides = [1, 1]} : vector<2x128xf32> to vector<2x32xf32>
    %78 = math.tanh %77 : vector<2x32xf32>
    %79 = arith.mulf %75, %43 : vector<2x32xf32>
    %80 = arith.mulf %74, %78 : vector<2x32xf32>
    %81 = arith.addf %79, %80 : vector<2x32xf32>
    %82 = math.tanh %81 : vector<2x32xf32>
    %83 = arith.mulf %76, %82 : vector<2x32xf32>
    %84 = arith.negf %68 : vector<2x128xf32>
    %85 = math.exp %84 : vector<2x128xf32>
    %cst_15 = arith.constant 1.000000e+00 : f32
    %86 = vector.broadcast %cst_15 : f32 to vector<2x128xf32>
    %87 = arith.addf %86, %85 : vector<2x128xf32>
    %88 = arith.divf %86, %87 : vector<2x128xf32>
    %89 = vector.extract_strided_slice %88 {offsets = [0, 0], sizes = [2, 32], strides = [1, 1]} : vector<2x128xf32> to vector<2x32xf32>
    %90 = vector.extract_strided_slice %88 {offsets = [0, 32], sizes = [2, 32], strides = [1, 1]} : vector<2x128xf32> to vector<2x32xf32>
    %91 = vector.extract_strided_slice %88 {offsets = [0, 96], sizes = [2, 32], strides = [1, 1]} : vector<2x128xf32> to vector<2x32xf32>
    %92 = vector.extract_strided_slice %68 {offsets = [0, 64], sizes = [2, 32], strides = [1, 1]} : vector<2x128xf32> to vector<2x32xf32>
    %93 = math.tanh %92 : vector<2x32xf32>
    %94 = arith.mulf %90, %58 : vector<2x32xf32>
    %95 = arith.mulf %89, %93 : vector<2x32xf32>
    %96 = arith.addf %94, %95 : vector<2x32xf32>
    %97 = math.tanh %96 : vector<2x32xf32>
    %98 = arith.mulf %91, %97 : vector<2x32xf32>
    %99 = tpu.concatenate %83, %98 in 1 : vector<2x32xf32>, vector<2x32xf32> -> vector<2x64xf32>
    %cst_16 = arith.constant dense<0.000000e+00> : vector<2x256xf32>
    %100 = tpu.matmul %99, %1, %cst_16 {dimension_numbers = #tpu.dot_dimension_numbers<[1], [0], [0], [1], [0, 0, 1, 1], [], []>} : vector<2x64xf32>, vector<64x256xf32>, vector<2x256xf32> -> vector<2x256xf32>
    %101 = vector.extract_strided_slice %5 {offsets = [6, 0], sizes = [2, 128], strides = [1, 1]} : vector<16x128xf32> to vector<2x128xf32>
    %102 = vector.extract_strided_slice %100 {offsets = [0, 0], sizes = [2, 128], strides = [1, 1]} : vector<2x256xf32> to vector<2x128xf32>
    %103 = arith.addf %101, %102 : vector<2x128xf32>
    %104 = vector.extract_strided_slice %100 {offsets = [0, 128], sizes = [2, 128], strides = [1, 1]} : vector<2x256xf32> to vector<2x128xf32>
    %105 = vector.broadcast %2 : vector<1x128xf32> to vector<2x128xf32>
    %106 = arith.addf %104, %105 : vector<2x128xf32>
    %107 = arith.negf %103 : vector<2x128xf32>
    %108 = math.exp %107 : vector<2x128xf32>
    %cst_17 = arith.constant 1.000000e+00 : f32
    %109 = vector.broadcast %cst_17 : f32 to vector<2x128xf32>
    %110 = arith.addf %109, %108 : vector<2x128xf32>
    %111 = arith.divf %109, %110 : vector<2x128xf32>
    %112 = vector.extract_strided_slice %111 {offsets = [0, 0], sizes = [2, 32], strides = [1, 1]} : vector<2x128xf32> to vector<2x32xf32>
    %113 = vector.extract_strided_slice %111 {offsets = [0, 32], sizes = [2, 32], strides = [1, 1]} : vector<2x128xf32> to vector<2x32xf32>
    %114 = vector.extract_strided_slice %111 {offsets = [0, 96], sizes = [2, 32], strides = [1, 1]} : vector<2x128xf32> to vector<2x32xf32>
    %115 = vector.extract_strided_slice %103 {offsets = [0, 64], sizes = [2, 32], strides = [1, 1]} : vector<2x128xf32> to vector<2x32xf32>
    %116 = math.tanh %115 : vector<2x32xf32>
    %117 = arith.mulf %113, %81 : vector<2x32xf32>
    %118 = arith.mulf %112, %116 : vector<2x32xf32>
    %119 = arith.addf %117, %118 : vector<2x32xf32>
    %120 = math.tanh %119 : vector<2x32xf32>
    %121 = arith.mulf %114, %120 : vector<2x32xf32>
    %122 = arith.negf %106 : vector<2x128xf32>
    %123 = math.exp %122 : vector<2x128xf32>
    %cst_18 = arith.constant 1.000000e+00 : f32
    %124 = vector.broadcast %cst_18 : f32 to vector<2x128xf32>
    %125 = arith.addf %124, %123 : vector<2x128xf32>
    %126 = arith.divf %124, %125 : vector<2x128xf32>
    %127 = vector.extract_strided_slice %126 {offsets = [0, 0], sizes = [2, 32], strides = [1, 1]} : vector<2x128xf32> to vector<2x32xf32>
    %128 = vector.extract_strided_slice %126 {offsets = [0, 32], sizes = [2, 32], strides = [1, 1]} : vector<2x128xf32> to vector<2x32xf32>
    %129 = vector.extract_strided_slice %126 {offsets = [0, 96], sizes = [2, 32], strides = [1, 1]} : vector<2x128xf32> to vector<2x32xf32>
    %130 = vector.extract_strided_slice %106 {offsets = [0, 64], sizes = [2, 32], strides = [1, 1]} : vector<2x128xf32> to vector<2x32xf32>
    %131 = math.tanh %130 : vector<2x32xf32>
    %132 = arith.mulf %128, %96 : vector<2x32xf32>
    %133 = arith.mulf %127, %131 : vector<2x32xf32>
    %134 = arith.addf %132, %133 : vector<2x32xf32>
    %135 = math.tanh %134 : vector<2x32xf32>
    %136 = arith.mulf %129, %135 : vector<2x32xf32>
    %137 = tpu.concatenate %121, %136 in 1 : vector<2x32xf32>, vector<2x32xf32> -> vector<2x64xf32>
    %cst_19 = arith.constant dense<0.000000e+00> : vector<2x256xf32>
    %138 = tpu.matmul %137, %1, %cst_19 {dimension_numbers = #tpu.dot_dimension_numbers<[1], [0], [0], [1], [0, 0, 1, 1], [], []>} : vector<2x64xf32>, vector<64x256xf32>, vector<2x256xf32> -> vector<2x256xf32>
    %139 = vector.extract_strided_slice %5 {offsets = [8, 0], sizes = [2, 128], strides = [1, 1]} : vector<16x128xf32> to vector<2x128xf32>
    %140 = vector.extract_strided_slice %138 {offsets = [0, 0], sizes = [2, 128], strides = [1, 1]} : vector<2x256xf32> to vector<2x128xf32>
    %141 = arith.addf %139, %140 : vector<2x128xf32>
    %142 = vector.extract_strided_slice %138 {offsets = [0, 128], sizes = [2, 128], strides = [1, 1]} : vector<2x256xf32> to vector<2x128xf32>
    %143 = vector.broadcast %2 : vector<1x128xf32> to vector<2x128xf32>
    %144 = arith.addf %142, %143 : vector<2x128xf32>
    %145 = arith.negf %141 : vector<2x128xf32>
    %146 = math.exp %145 : vector<2x128xf32>
    %cst_20 = arith.constant 1.000000e+00 : f32
    %147 = vector.broadcast %cst_20 : f32 to vector<2x128xf32>
    %148 = arith.addf %147, %146 : vector<2x128xf32>
    %149 = arith.divf %147, %148 : vector<2x128xf32>
    %150 = vector.extract_strided_slice %149 {offsets = [0, 0], sizes = [2, 32], strides = [1, 1]} : vector<2x128xf32> to vector<2x32xf32>
    %151 = vector.extract_strided_slice %149 {offsets = [0, 32], sizes = [2, 32], strides = [1, 1]} : vector<2x128xf32> to vector<2x32xf32>
    %152 = vector.extract_strided_slice %149 {offsets = [0, 96], sizes = [2, 32], strides = [1, 1]} : vector<2x128xf32> to vector<2x32xf32>
    %153 = vector.extract_strided_slice %141 {offsets = [0, 64], sizes = [2, 32], strides = [1, 1]} : vector<2x128xf32> to vector<2x32xf32>
    %154 = math.tanh %153 : vector<2x32xf32>
    %155 = arith.mulf %151, %119 : vector<2x32xf32>
    %156 = arith.mulf %150, %154 : vector<2x32xf32>
    %157 = arith.addf %155, %156 : vector<2x32xf32>
    %158 = math.tanh %157 : vector<2x32xf32>
    %159 = arith.mulf %152, %158 : vector<2x32xf32>
    %160 = arith.negf %144 : vector<2x128xf32>
    %161 = math.exp %160 : vector<2x128xf32>
    %cst_21 = arith.constant 1.000000e+00 : f32
    %162 = vector.broadcast %cst_21 : f32 to vector<2x128xf32>
    %163 = arith.addf %162, %161 : vector<2x128xf32>
    %164 = arith.divf %162, %163 : vector<2x128xf32>
    %165 = vector.extract_strided_slice %164 {offsets = [0, 0], sizes = [2, 32], strides = [1, 1]} : vector<2x128xf32> to vector<2x32xf32>
    %166 = vector.extract_strided_slice %164 {offsets = [0, 32], sizes = [2, 32], strides = [1, 1]} : vector<2x128xf32> to vector<2x32xf32>
    %167 = vector.extract_strided_slice %164 {offsets = [0, 96], sizes = [2, 32], strides = [1, 1]} : vector<2x128xf32> to vector<2x32xf32>
    %168 = vector.extract_strided_slice %144 {offsets = [0, 64], sizes = [2, 32], strides = [1, 1]} : vector<2x128xf32> to vector<2x32xf32>
    %169 = math.tanh %168 : vector<2x32xf32>
    %170 = arith.mulf %166, %134 : vector<2x32xf32>
    %171 = arith.mulf %165, %169 : vector<2x32xf32>
    %172 = arith.addf %170, %171 : vector<2x32xf32>
    %173 = math.tanh %172 : vector<2x32xf32>
    %174 = arith.mulf %167, %173 : vector<2x32xf32>
    %175 = tpu.concatenate %159, %174 in 1 : vector<2x32xf32>, vector<2x32xf32> -> vector<2x64xf32>
    %cst_22 = arith.constant dense<0.000000e+00> : vector<2x256xf32>
    %176 = tpu.matmul %175, %1, %cst_22 {dimension_numbers = #tpu.dot_dimension_numbers<[1], [0], [0], [1], [0, 0, 1, 1], [], []>} : vector<2x64xf32>, vector<64x256xf32>, vector<2x256xf32> -> vector<2x256xf32>
    %177 = vector.extract_strided_slice %5 {offsets = [10, 0], sizes = [2, 128], strides = [1, 1]} : vector<16x128xf32> to vector<2x128xf32>
    %178 = vector.extract_strided_slice %176 {offsets = [0, 0], sizes = [2, 128], strides = [1, 1]} : vector<2x256xf32> to vector<2x128xf32>
    %179 = arith.addf %177, %178 : vector<2x128xf32>
    %180 = vector.extract_strided_slice %176 {offsets = [0, 128], sizes = [2, 128], strides = [1, 1]} : vector<2x256xf32> to vector<2x128xf32>
    %181 = vector.broadcast %2 : vector<1x128xf32> to vector<2x128xf32>
    %182 = arith.addf %180, %181 : vector<2x128xf32>
    %183 = arith.negf %179 : vector<2x128xf32>
    %184 = math.exp %183 : vector<2x128xf32>
    %cst_23 = arith.constant 1.000000e+00 : f32
    %185 = vector.broadcast %cst_23 : f32 to vector<2x128xf32>
    %186 = arith.addf %185, %184 : vector<2x128xf32>
    %187 = arith.divf %185, %186 : vector<2x128xf32>
    %188 = vector.extract_strided_slice %187 {offsets = [0, 0], sizes = [2, 32], strides = [1, 1]} : vector<2x128xf32> to vector<2x32xf32>
    %189 = vector.extract_strided_slice %187 {offsets = [0, 32], sizes = [2, 32], strides = [1, 1]} : vector<2x128xf32> to vector<2x32xf32>
    %190 = vector.extract_strided_slice %187 {offsets = [0, 96], sizes = [2, 32], strides = [1, 1]} : vector<2x128xf32> to vector<2x32xf32>
    %191 = vector.extract_strided_slice %179 {offsets = [0, 64], sizes = [2, 32], strides = [1, 1]} : vector<2x128xf32> to vector<2x32xf32>
    %192 = math.tanh %191 : vector<2x32xf32>
    %193 = arith.mulf %189, %157 : vector<2x32xf32>
    %194 = arith.mulf %188, %192 : vector<2x32xf32>
    %195 = arith.addf %193, %194 : vector<2x32xf32>
    %196 = math.tanh %195 : vector<2x32xf32>
    %197 = arith.mulf %190, %196 : vector<2x32xf32>
    %198 = arith.negf %182 : vector<2x128xf32>
    %199 = math.exp %198 : vector<2x128xf32>
    %cst_24 = arith.constant 1.000000e+00 : f32
    %200 = vector.broadcast %cst_24 : f32 to vector<2x128xf32>
    %201 = arith.addf %200, %199 : vector<2x128xf32>
    %202 = arith.divf %200, %201 : vector<2x128xf32>
    %203 = vector.extract_strided_slice %202 {offsets = [0, 0], sizes = [2, 32], strides = [1, 1]} : vector<2x128xf32> to vector<2x32xf32>
    %204 = vector.extract_strided_slice %202 {offsets = [0, 32], sizes = [2, 32], strides = [1, 1]} : vector<2x128xf32> to vector<2x32xf32>
    %205 = vector.extract_strided_slice %202 {offsets = [0, 96], sizes = [2, 32], strides = [1, 1]} : vector<2x128xf32> to vector<2x32xf32>
    %206 = vector.extract_strided_slice %182 {offsets = [0, 64], sizes = [2, 32], strides = [1, 1]} : vector<2x128xf32> to vector<2x32xf32>
    %207 = math.tanh %206 : vector<2x32xf32>
    %208 = arith.mulf %204, %172 : vector<2x32xf32>
    %209 = arith.mulf %203, %207 : vector<2x32xf32>
    %210 = arith.addf %208, %209 : vector<2x32xf32>
    %211 = math.tanh %210 : vector<2x32xf32>
    %212 = arith.mulf %205, %211 : vector<2x32xf32>
    %213 = tpu.concatenate %197, %212 in 1 : vector<2x32xf32>, vector<2x32xf32> -> vector<2x64xf32>
    %cst_25 = arith.constant dense<0.000000e+00> : vector<2x256xf32>
    %214 = tpu.matmul %213, %1, %cst_25 {dimension_numbers = #tpu.dot_dimension_numbers<[1], [0], [0], [1], [0, 0, 1, 1], [], []>} : vector<2x64xf32>, vector<64x256xf32>, vector<2x256xf32> -> vector<2x256xf32>
    %215 = vector.extract_strided_slice %5 {offsets = [12, 0], sizes = [2, 128], strides = [1, 1]} : vector<16x128xf32> to vector<2x128xf32>
    %216 = vector.extract_strided_slice %214 {offsets = [0, 0], sizes = [2, 128], strides = [1, 1]} : vector<2x256xf32> to vector<2x128xf32>
    %217 = arith.addf %215, %216 : vector<2x128xf32>
    %218 = vector.extract_strided_slice %214 {offsets = [0, 128], sizes = [2, 128], strides = [1, 1]} : vector<2x256xf32> to vector<2x128xf32>
    %219 = vector.broadcast %2 : vector<1x128xf32> to vector<2x128xf32>
    %220 = arith.addf %218, %219 : vector<2x128xf32>
    %221 = arith.negf %217 : vector<2x128xf32>
    %222 = math.exp %221 : vector<2x128xf32>
    %cst_26 = arith.constant 1.000000e+00 : f32
    %223 = vector.broadcast %cst_26 : f32 to vector<2x128xf32>
    %224 = arith.addf %223, %222 : vector<2x128xf32>
    %225 = arith.divf %223, %224 : vector<2x128xf32>
    %226 = vector.extract_strided_slice %225 {offsets = [0, 0], sizes = [2, 32], strides = [1, 1]} : vector<2x128xf32> to vector<2x32xf32>
    %227 = vector.extract_strided_slice %225 {offsets = [0, 32], sizes = [2, 32], strides = [1, 1]} : vector<2x128xf32> to vector<2x32xf32>
    %228 = vector.extract_strided_slice %225 {offsets = [0, 96], sizes = [2, 32], strides = [1, 1]} : vector<2x128xf32> to vector<2x32xf32>
    %229 = vector.extract_strided_slice %217 {offsets = [0, 64], sizes = [2, 32], strides = [1, 1]} : vector<2x128xf32> to vector<2x32xf32>
    %230 = math.tanh %229 : vector<2x32xf32>
    %231 = arith.mulf %227, %195 : vector<2x32xf32>
    %232 = arith.mulf %226, %230 : vector<2x32xf32>
    %233 = arith.addf %231, %232 : vector<2x32xf32>
    %234 = math.tanh %233 : vector<2x32xf32>
    %235 = arith.mulf %228, %234 : vector<2x32xf32>
    %236 = arith.negf %220 : vector<2x128xf32>
    %237 = math.exp %236 : vector<2x128xf32>
    %cst_27 = arith.constant 1.000000e+00 : f32
    %238 = vector.broadcast %cst_27 : f32 to vector<2x128xf32>
    %239 = arith.addf %238, %237 : vector<2x128xf32>
    %240 = arith.divf %238, %239 : vector<2x128xf32>
    %241 = vector.extract_strided_slice %240 {offsets = [0, 0], sizes = [2, 32], strides = [1, 1]} : vector<2x128xf32> to vector<2x32xf32>
    %242 = vector.extract_strided_slice %240 {offsets = [0, 32], sizes = [2, 32], strides = [1, 1]} : vector<2x128xf32> to vector<2x32xf32>
    %243 = vector.extract_strided_slice %240 {offsets = [0, 96], sizes = [2, 32], strides = [1, 1]} : vector<2x128xf32> to vector<2x32xf32>
    %244 = vector.extract_strided_slice %220 {offsets = [0, 64], sizes = [2, 32], strides = [1, 1]} : vector<2x128xf32> to vector<2x32xf32>
    %245 = math.tanh %244 : vector<2x32xf32>
    %246 = arith.mulf %242, %210 : vector<2x32xf32>
    %247 = arith.mulf %241, %245 : vector<2x32xf32>
    %248 = arith.addf %246, %247 : vector<2x32xf32>
    %249 = math.tanh %248 : vector<2x32xf32>
    %250 = arith.mulf %243, %249 : vector<2x32xf32>
    %251 = tpu.concatenate %235, %250 in 1 : vector<2x32xf32>, vector<2x32xf32> -> vector<2x64xf32>
    %cst_28 = arith.constant dense<0.000000e+00> : vector<2x256xf32>
    %252 = tpu.matmul %251, %1, %cst_28 {dimension_numbers = #tpu.dot_dimension_numbers<[1], [0], [0], [1], [0, 0, 1, 1], [], []>} : vector<2x64xf32>, vector<64x256xf32>, vector<2x256xf32> -> vector<2x256xf32>
    %253 = vector.extract_strided_slice %5 {offsets = [14, 0], sizes = [2, 128], strides = [1, 1]} : vector<16x128xf32> to vector<2x128xf32>
    %254 = vector.extract_strided_slice %252 {offsets = [0, 0], sizes = [2, 128], strides = [1, 1]} : vector<2x256xf32> to vector<2x128xf32>
    %255 = arith.addf %253, %254 : vector<2x128xf32>
    %256 = vector.extract_strided_slice %252 {offsets = [0, 128], sizes = [2, 128], strides = [1, 1]} : vector<2x256xf32> to vector<2x128xf32>
    %257 = vector.broadcast %2 : vector<1x128xf32> to vector<2x128xf32>
    %258 = arith.addf %256, %257 : vector<2x128xf32>
    %259 = arith.negf %255 : vector<2x128xf32>
    %260 = math.exp %259 : vector<2x128xf32>
    %cst_29 = arith.constant 1.000000e+00 : f32
    %261 = vector.broadcast %cst_29 : f32 to vector<2x128xf32>
    %262 = arith.addf %261, %260 : vector<2x128xf32>
    %263 = arith.divf %261, %262 : vector<2x128xf32>
    %264 = vector.extract_strided_slice %263 {offsets = [0, 0], sizes = [2, 32], strides = [1, 1]} : vector<2x128xf32> to vector<2x32xf32>
    %265 = vector.extract_strided_slice %263 {offsets = [0, 32], sizes = [2, 32], strides = [1, 1]} : vector<2x128xf32> to vector<2x32xf32>
    %266 = vector.extract_strided_slice %263 {offsets = [0, 96], sizes = [2, 32], strides = [1, 1]} : vector<2x128xf32> to vector<2x32xf32>
    %267 = vector.extract_strided_slice %255 {offsets = [0, 64], sizes = [2, 32], strides = [1, 1]} : vector<2x128xf32> to vector<2x32xf32>
    %268 = math.tanh %267 : vector<2x32xf32>
    %269 = arith.mulf %265, %233 : vector<2x32xf32>
    %270 = arith.mulf %264, %268 : vector<2x32xf32>
    %271 = arith.addf %269, %270 : vector<2x32xf32>
    %272 = math.tanh %271 : vector<2x32xf32>
    %273 = arith.mulf %266, %272 : vector<2x32xf32>
    %274 = arith.negf %258 : vector<2x128xf32>
    %275 = math.exp %274 : vector<2x128xf32>
    %cst_30 = arith.constant 1.000000e+00 : f32
    %276 = vector.broadcast %cst_30 : f32 to vector<2x128xf32>
    %277 = arith.addf %276, %275 : vector<2x128xf32>
    %278 = arith.divf %276, %277 : vector<2x128xf32>
    %279 = vector.extract_strided_slice %278 {offsets = [0, 0], sizes = [2, 32], strides = [1, 1]} : vector<2x128xf32> to vector<2x32xf32>
    %280 = vector.extract_strided_slice %278 {offsets = [0, 32], sizes = [2, 32], strides = [1, 1]} : vector<2x128xf32> to vector<2x32xf32>
    %281 = vector.extract_strided_slice %278 {offsets = [0, 96], sizes = [2, 32], strides = [1, 1]} : vector<2x128xf32> to vector<2x32xf32>
    %282 = vector.extract_strided_slice %258 {offsets = [0, 64], sizes = [2, 32], strides = [1, 1]} : vector<2x128xf32> to vector<2x32xf32>
    %283 = math.tanh %282 : vector<2x32xf32>
    %284 = arith.mulf %280, %248 : vector<2x32xf32>
    %285 = arith.mulf %279, %283 : vector<2x32xf32>
    %286 = arith.addf %284, %285 : vector<2x32xf32>
    %287 = math.tanh %286 : vector<2x32xf32>
    %288 = arith.mulf %281, %287 : vector<2x32xf32>
    %289 = tpu.concatenate %273, %288 in 1 : vector<2x32xf32>, vector<2x32xf32> -> vector<2x64xf32>
    %290 = vector.extract_strided_slice %1 {offsets = [0, 128], sizes = [64, 128], strides = [1, 1]} : vector<64x256xf32> to vector<64x128xf32>
    %cst_31 = arith.constant dense<0.000000e+00> : vector<2x128xf32>
    %291 = tpu.matmul %289, %290, %cst_31 {dimension_numbers = #tpu.dot_dimension_numbers<[1], [0], [0], [1], [0, 0, 1, 1], [], []>} : vector<2x64xf32>, vector<64x128xf32>, vector<2x128xf32> -> vector<2x128xf32>
    %292 = vector.broadcast %2 : vector<1x128xf32> to vector<2x128xf32>
    %293 = arith.addf %291, %292 : vector<2x128xf32>
    %294 = arith.negf %293 : vector<2x128xf32>
    %295 = math.exp %294 : vector<2x128xf32>
    %cst_32 = arith.constant 1.000000e+00 : f32
    %296 = vector.broadcast %cst_32 : f32 to vector<2x128xf32>
    %297 = arith.addf %296, %295 : vector<2x128xf32>
    %298 = arith.divf %296, %297 : vector<2x128xf32>
    %299 = vector.extract_strided_slice %298 {offsets = [0, 0], sizes = [2, 32], strides = [1, 1]} : vector<2x128xf32> to vector<2x32xf32>
    %300 = vector.extract_strided_slice %298 {offsets = [0, 32], sizes = [2, 32], strides = [1, 1]} : vector<2x128xf32> to vector<2x32xf32>
    %301 = vector.extract_strided_slice %298 {offsets = [0, 96], sizes = [2, 32], strides = [1, 1]} : vector<2x128xf32> to vector<2x32xf32>
    %302 = vector.extract_strided_slice %293 {offsets = [0, 64], sizes = [2, 32], strides = [1, 1]} : vector<2x128xf32> to vector<2x32xf32>
    %303 = math.tanh %302 : vector<2x32xf32>
    %304 = arith.mulf %300, %286 : vector<2x32xf32>
    %305 = arith.mulf %299, %303 : vector<2x32xf32>
    %306 = arith.addf %304, %305 : vector<2x32xf32>
    %307 = math.tanh %306 : vector<2x32xf32>
    %308 = arith.mulf %301, %307 : vector<2x32xf32>
    %309 = tpu.concatenate %273, %308 in 1 : vector<2x32xf32>, vector<2x32xf32> -> vector<2x64xf32>
    %c0_33 = arith.constant 0 : index
    %c0_34 = arith.constant 0 : index
    %310 = vector.load %arg5[%c0_33, %c0_34] : memref<64x8xf32, #tpu.memory_space<vmem>>, vector<64x8xf32>
    %cst_35 = arith.constant dense<0.000000e+00> : vector<2x8xf32>
    %311 = tpu.matmul %309, %310, %cst_35 {dimension_numbers = #tpu.dot_dimension_numbers<[1], [0], [0], [1], [0, 0, 1, 1], [], []>} : vector<2x64xf32>, vector<64x8xf32>, vector<2x8xf32> -> vector<2x8xf32>
    %c0_36 = arith.constant 0 : index
    %c0_37 = arith.constant 0 : index
    %312 = vector.load %arg6[%c0_36, %c0_37] : memref<1x8xf32, #tpu.memory_space<vmem>>, vector<1x8xf32>
    %313 = vector.broadcast %312 : vector<1x8xf32> to vector<2x8xf32>
    %314 = arith.addf %311, %313 : vector<2x8xf32>
    %c0_38 = arith.constant 0 : index
    %c0_39 = arith.constant 0 : index
    %c0_40 = arith.constant 0 : index
    %315 = vector.load %arg7[%c0_38, %c0_39, %c0_40] : memref<1x2x8xf32, #tpu.memory_space<vmem>>, vector<1x2x8xf32>
    %316 = vector.shape_cast %315 : vector<1x2x8xf32> to vector<2x8xf32>
    %317 = vector.shape_cast %314 : vector<2x8xf32> to vector<1x2x8xf32>
    tpu.vector_store %arg7[%c0_38, %c0_39, %c0_40], %317 {strides = array<i32>} : memref<1x2x8xf32, #tpu.memory_space<vmem>>, vector<1x2x8xf32>,
    return
  }
  func.func @transform_0(%arg0: i32) -> (i32, i32, i32) {
    %c0_i32 = arith.constant 0 : i32
    %c0_i32_0 = arith.constant 0 : i32
    %c0_i32_1 = arith.constant 0 : i32
    return %arg0, %c0_i32, %c0_i32_0 : i32, i32, i32
  }
  func.func @transform_1(%arg0: i32) -> (i32, i32) {
    %c0_i32 = arith.constant 0 : i32
    %c0_i32_0 = arith.constant 0 : i32
    %c0_i32_1 = arith.constant 0 : i32
    return %c0_i32, %c0_i32_0 : i32, i32
  }
  func.func @transform_2(%arg0: i32) -> (i32, i32) {
    %c0_i32 = arith.constant 0 : i32
    %c0_i32_0 = arith.constant 0 : i32
    %c0_i32_1 = arith.constant 0 : i32
    return %c0_i32, %c0_i32_0 : i32, i32
  }
  func.func @transform_3(%arg0: i32) -> (i32, i32) {
    %c0_i32 = arith.constant 0 : i32
    %c0_i32_0 = arith.constant 0 : i32
    %c0_i32_1 = arith.constant 0 : i32
    return %c0_i32, %c0_i32_0 : i32, i32
  }
  func.func @transform_4(%arg0: i32) -> (i32, i32) {
    %c0_i32 = arith.constant 0 : i32
    %c0_i32_0 = arith.constant 0 : i32
    %c0_i32_1 = arith.constant 0 : i32
    return %c0_i32, %c0_i32_0 : i32, i32
  }
  func.func @transform_5(%arg0: i32) -> (i32, i32) {
    %c0_i32 = arith.constant 0 : i32
    %c0_i32_0 = arith.constant 0 : i32
    %c0_i32_1 = arith.constant 0 : i32
    return %c0_i32, %c0_i32_0 : i32, i32
  }
  func.func @transform_6(%arg0: i32) -> (i32, i32, i32) {
    %c0_i32 = arith.constant 0 : i32
    %c0_i32_0 = arith.constant 0 : i32
    %c0_i32_1 = arith.constant 0 : i32
    return %arg0, %c0_i32, %c0_i32_0 : i32, i32, i32
  }
}

</mosaic_0001>

<llo_original>
// kernel: tpu_custom_call.1
$region0: #{tpu_custom_call.1}
  #allocation0 [shape = 'u32[]', space=smem, size = 0x4, offset = 0x4, fixed_abs, tag = 'smem constant byte address 0x4 - core index']
  #allocation1 [shape = 'u32[144,128]{1,0:T(1,128)}', space=vmem, size = 0x12000, scoped, tag = 'internal scratch']
  %s0 = inlined_call_operand.hbm [shape: f32[8,16,16], index: 0, kind: input, shape index: {}]
  %s1 = inlined_call_operand.vmem [shape: f32[16,128], index: 1, kind: input, shape index: {}]
  %s2 = inlined_call_operand.hbm [shape: f32[64,256], index: 2, kind: input, shape index: {}]
  %s3 = inlined_call_operand.vmem [shape: f32[1,128], index: 3, kind: input, shape index: {}]
  %s4 = inlined_call_operand.vmem [shape: f32[64,8], index: 4, kind: input, shape index: {}]
  %s5 = inlined_call_operand.vmem [shape: f32[1,8], index: 5, kind: input, shape index: {}]
  %s6 = inlined_call_operand.hbm [shape: f32[8,2,8], index: 6, kind: output, shape index: {}]
  %s7 = sld [smem:[#allocation0]]
  $region65: #{tpu_custom_call.1} parent=0
    _
  %s9 = ssub.s32 1, %s7
  %s10 = scalar_select 0, %s9, %s7
  $region1: #{tpu_custom_call.1} parent=0
    #allocation2 [shape = 'u8[16384]{0}', space=vmem, size = 0x4000, scoped, tag = 'input window, operand 0']
    #allocation3 [shape = 's32[2]{0}', space=sflag, size = 0x8, scoped, tag = 'scoped memory for tpu_custom_call.1']
    #allocation4 [shape = 's32[2]{0}', space=sflag, size = 0x8, scoped, tag = 'scoped memory for tpu_custom_call.1']
    #allocation5 [shape = 'u8[65536]{0}', space=vmem, size = 0x10000, scoped, tag = 'input window, operand 2, single buffered']
    #allocation6 [shape = 's32[1]{0}', space=sflag, size = 0x4, scoped, tag = 'scoped memory for tpu_custom_call.1']
    #allocation7 [shape = 'u8[2048]{0}', space=vmem, size = 0x800, scoped, tag = 'output window, operand 0']
    %11 = vsyncpa [#allocation3], 0
    %s12 = scalar_lea.sflag [#allocation3], 1
    %13 = vsyncpa %s12, 0
    %14 = vsyncpa [#allocation6], 0
    %15 = vsyncpa [#allocation4], 0
    %s16 = scalar_lea.sflag [#allocation4], 1
    %17 = vsyncpa %s16, 0
    loop: start=0, step=1, limit=10
    $region2: #{tpu_custom_call.1} parent=1 // loop_pre_header
      _
    $region3: #{tpu_custom_call.1} parent=1 // loop_header
      %s19 = sphi 0, %s23
      %p20 = scmp.ge.s32.totalorder %s19, 10
      %s29 = sphi 0, %s31
      %s32 = sphi 0, %s29
      %s33 = sphi 0, %s32
      %s49 = sphi 0, %s33
      %s53 = sphi 0, %s53
      %s55 = sphi 0, %s53
      %s56 = sphi 0, %s55
      %s70 = sphi 0, %s56
      %s74 = sphi 0, %s74
      %s76 = sphi 0, %s74
      %s77 = sphi 0, %s76
      %s91 = sphi 0, %s77
      %s95 = sphi 0, %s95
      %s97 = sphi 0, %s95
      %s98 = sphi 0, %s97
      %s112 = sphi 0, %s98
      %s116 = sphi 0, %s116
      %s118 = sphi 0, %s116
      %s119 = sphi 0, %s118
      %s133 = sphi 0, %s119
      %s137 = sphi 0, %s137
      %s139 = sphi 0, %s137
      %s140 = sphi 0, %s139
      %s154 = sphi 0, %s140
      %s160 = sphi 0, %s162
      %s163 = sphi 0, %s160
      %s164 = sphi 0, %s163
      %s180 = sphi 0, %s164
    $region4: #{tpu_custom_call.1} parent=1 // loop_header_branch
      %22 = sbr.rel (%p20) target = $region8
    $region5: #{tpu_custom_call.1} parent=1 // loop_body
      %s24 = ssub.s32 %s19, 1
      %s25 = ssub.s32 %s19, 2
      %s26 = sadd.s32 %s19, 1
      %s27 = ssub.s32 %s19, %s26
      %p28 = scmp.eq.s32.totalorder %s27, 0
      %s30 = sadd.s32 %s29, 1
      %s31 = scalar_select %p28, %s29, %s30
      %p34 = pneg %p28
      %p35 = scmp.eq.s32.totalorder %s19, 7
      %p36 = por %p34, %p35
      %p37 = scmp.ne.s32.totalorder %s29, %s32
      %p38 = scmp.eq.s32.totalorder %s19, 0
      %p39 = por %p37, %p38
      %p40 = scmp.ne.s32.totalorder %s29, %s32
      %p41 = scmp.eq.s32.totalorder %s24, 7
      %p42 = por %p40, %p41
      %p43 = scmp.ne.s32.totalorder %s32, %s33
      %p44 = scmp.eq.s32.totalorder %s24, 0
      %p45 = por %p43, %p44
      %p46 = scmp.ne.s32.totalorder %s32, %s33
      %p47 = scmp.eq.s32.totalorder %s25, 7
      %p48 = por %p46, %p47
      %p50 = scmp.ne.s32.totalorder %s33, %s49
      %p51 = scmp.eq.s32.totalorder %s25, 0
      %p52 = por %p50, %p51
      %s54 = sadd.s32 %s53, 1
      %p57 = scmp.eq.s32.totalorder %s19, 7
      %p58 = scmp.ne.s32.totalorder %s53, %s55
      %p59 = scmp.eq.s32.totalorder %s19, 0
      %p60 = por %p58, %p59
      %p61 = scmp.ne.s32.totalorder %s53, %s55
      %p62 = scmp.eq.s32.totalorder %s24, 7
      %p63 = por %p61, %p62
      %p64 = scmp.ne.s32.totalorder %s55, %s56
      %p65 = scmp.eq.s32.totalorder %s24, 0
      %p66 = por %p64, %p65
      %p67 = scmp.ne.s32.totalorder %s55, %s56
      %p68 = scmp.eq.s32.totalorder %s25, 7
      %p69 = por %p67, %p68
      %p71 = scmp.ne.s32.totalorder %s56, %s70
      %p72 = scmp.eq.s32.totalorder %s25, 0
      %p73 = por %p71, %p72
      %s75 = sadd.s32 %s74, 1
      %p78 = scmp.eq.s32.totalorder %s19, 7
      %p79 = scmp.ne.s32.totalorder %s74, %s76
      %p80 = scmp.eq.s32.totalorder %s19, 0
      %p81 = por %p79, %p80
      %p82 = scmp.ne.s32.totalorder %s74, %s76
      %p83 = scmp.eq.s32.totalorder %s24, 7
      %p84 = por %p82, %p83
      %p85 = scmp.ne.s32.totalorder %s76, %s77
      %p86 = scmp.eq.s32.totalorder %s24, 0
      %p87 = por %p85, %p86
      %p88 = scmp.ne.s32.totalorder %s76, %s77
      %p89 = scmp.eq.s32.totalorder %s25, 7
      %p90 = por %p88, %p89
      %p92 = scmp.ne.s32.totalorder %s77, %s91
      %p93 = scmp.eq.s32.totalorder %s25, 0
      %p94 = por %p92, %p93
      %s96 = sadd.s32 %s95, 1
      %p99 = scmp.eq.s32.totalorder %s19, 7
      %p100 = scmp.ne.s32.totalorder %s95, %s97
      %p101 = scmp.eq.s32.totalorder %s19, 0
      %p102 = por %p100, %p101
      %p103 = scmp.ne.s32.totalorder %s95, %s97
      %p104 = scmp.eq.s32.totalorder %s24, 7
      %p105 = por %p103, %p104
      %p106 = scmp.ne.s32.totalorder %s97, %s98
      %p107 = scmp.eq.s32.totalorder %s24, 0
      %p108 = por %p106, %p107
      %p109 = scmp.ne.s32.totalorder %s97, %s98
      %p110 = scmp.eq.s32.totalorder %s25, 7
      %p111 = por %p109, %p110
      %p113 = scmp.ne.s32.totalorder %s98, %s112
      %p114 = scmp.eq.s32.totalorder %s25, 0
      %p115 = por %p113, %p114
      %s117 = sadd.s32 %s116, 1
      %p120 = scmp.eq.s32.totalorder %s19, 7
      %p121 = scmp.ne.s32.totalorder %s116, %s118
      %p122 = scmp.eq.s32.totalorder %s19, 0
      %p123 = por %p121, %p122
      %p124 = scmp.ne.s32.totalorder %s116, %s118
      %p125 = scmp.eq.s32.totalorder %s24, 7
      %p126 = por %p124, %p125
      %p127 = scmp.ne.s32.totalorder %s118, %s119
      %p128 = scmp.eq.s32.totalorder %s24, 0
      %p129 = por %p127, %p128
      %p130 = scmp.ne.s32.totalorder %s118, %s119
      %p131 = scmp.eq.s32.totalorder %s25, 7
      %p132 = por %p130, %p131
      %p134 = scmp.ne.s32.totalorder %s119, %s133
      %p135 = scmp.eq.s32.totalorder %s25, 0
      %p136 = por %p134, %p135
      %s138 = sadd.s32 %s137, 1
      %p141 = scmp.eq.s32.totalorder %s19, 7
      %p142 = scmp.ne.s32.totalorder %s137, %s139
      %p143 = scmp.eq.s32.totalorder %s19, 0
      %p144 = por %p142, %p143
      %p145 = scmp.ne.s32.totalorder %s137, %s139
      %p146 = scmp.eq.s32.totalorder %s24, 7
      %p147 = por %p145, %p146
      %p148 = scmp.ne.s32.totalorder %s139, %s140
      %p149 = scmp.eq.s32.totalorder %s24, 0
      %p150 = por %p148, %p149
      %p151 = scmp.ne.s32.totalorder %s139, %s140
      %p152 = scmp.eq.s32.totalorder %s25, 7
      %p153 = por %p151, %p152
      %p155 = scmp.ne.s32.totalorder %s140, %s154
      %p156 = scmp.eq.s32.totalorder %s25, 0
      %p157 = por %p155, %p156
      %s158 = ssub.s32 %s19, %s26
      %p159 = scmp.eq.s32.totalorder %s158, 0
      %s161 = sadd.s32 %s160, 1
      %s162 = scalar_select %p159, %s160, %s161
      %p165 = pneg %p159
      %p166 = scmp.eq.s32.totalorder %s19, 7
      %p167 = por %p165, %p166
      %p168 = scmp.ne.s32.totalorder %s160, %s163
      %p169 = scmp.eq.s32.totalorder %s19, 0
      %p170 = por %p168, %p169
      %p171 = scmp.ne.s32.totalorder %s160, %s163
      %p172 = scmp.eq.s32.totalorder %s24, 7
      %p173 = por %p171, %p172
      %p174 = scmp.ne.s32.totalorder %s163, %s164
      %p175 = scmp.eq.s32.totalorder %s24, 0
      %p176 = por %p174, %p175
      %p177 = scmp.ne.s32.totalorder %s163, %s164
      %p178 = scmp.eq.s32.totalorder %s25, 7
      %p179 = por %p177, %p178
      %p181 = scmp.ne.s32.totalorder %s164, %s180
      %p182 = scmp.eq.s32.totalorder %s25, 0
      %p183 = por %p181, %p182
      %p184 = scmp.le.s32.totalorder 1, %s19
      %p185 = scmp.lt.s32.totalorder %s19, 9
      %p186 = pnand %p184, %p185
      %p187 = pneg %p186
      // Predicated region
      $region9: #{tpu_custom_call.1} parent=5 // pred_check
        _
      $region10: #{tpu_custom_call.1} parent=5 // pred_check_branch
        %189 = sbr.rel (%p186) target = $region12
      $region11: #{tpu_custom_call.1} parent=5 // pred_region
        %s190 = ssub.s32 %s19, 1
        // Predicated region
        $region13: #{tpu_custom_call.1} parent=11 // pred_check
          %p191 = pneg %p66
        $region14: #{tpu_custom_call.1} parent=11 // pred_check_branch
          %193 = sbr.rel (%p191) target = $region16
        $region15: #{tpu_custom_call.1} parent=11 // pred_region
          _
        $region16: #{tpu_custom_call.1} parent=11 // pred_fallthru
          _
        // Predicated region
        $region17: #{tpu_custom_call.1} parent=11 // pred_check
          %p194 = pneg %p87
        $region18: #{tpu_custom_call.1} parent=11 // pred_check_branch
          %196 = sbr.rel (%p194) target = $region20
        $region19: #{tpu_custom_call.1} parent=11 // pred_region
          %s198 = ssub.s32 2048, 2048
          %199 = vsyncadd [#allocation6], %s198
          %s200 = sshll.u32 [#allocation5], 4
          %s201 = int_to_ptr.vmem [resolvable:$true] %s200
          %206 = dma.hbm_to_vmem [thread:$0]  %s2, 2048, %s201, [#allocation6], 256, 256, 16
        $region20: #{tpu_custom_call.1} parent=11 // pred_fallthru
          _
        // Predicated region
        $region21: #{tpu_custom_call.1} parent=11 // pred_check
          %p207 = pneg %p108
        $region22: #{tpu_custom_call.1} parent=11 // pred_check_branch
          %209 = sbr.rel (%p207) target = $region24
        $region23: #{tpu_custom_call.1} parent=11 // pred_region
          _
        $region24: #{tpu_custom_call.1} parent=11 // pred_fallthru
          _
        // Predicated region
        $region25: #{tpu_custom_call.1} parent=11 // pred_check
          %p210 = pneg %p129
        $region26: #{tpu_custom_call.1} parent=11 // pred_check_branch
          %212 = sbr.rel (%p210) target = $region28
        $region27: #{tpu_custom_call.1} parent=11 // pred_region
          _
        $region28: #{tpu_custom_call.1} parent=11 // pred_fallthru
          _
        // Predicated region
        $region29: #{tpu_custom_call.1} parent=11 // pred_check
          %p213 = pneg %p150
        $region30: #{tpu_custom_call.1} parent=11 // pred_check_branch
          %215 = sbr.rel (%p213) target = $region32
        $region31: #{tpu_custom_call.1} parent=11 // pred_region
          _
        $region32: #{tpu_custom_call.1} parent=11 // pred_fallthru
          _
      $region12: #{tpu_custom_call.1} parent=5 // pred_fallthru
        _
      %p216 = scmp.lt.s32.totalorder %s19, 8
      // Predicated region
      $region33: #{tpu_custom_call.1} parent=5 // pred_check
        %p217 = pneg %p216
      $region34: #{tpu_custom_call.1} parent=5 // pred_check_branch
        %219 = sbr.rel (%p217) target = $region36
      $region35: #{tpu_custom_call.1} parent=5 // pred_region
        // Predicated region
        $region37: #{tpu_custom_call.1} parent=35 // pred_check
          %p220 = pneg %p39
        $region38: #{tpu_custom_call.1} parent=35 // pred_check_branch
          %222 = sbr.rel (%p220) target = $region40
        $region39: #{tpu_custom_call.1} parent=35 // pred_region
          %s223 = sand.u32 %s29, 1
          %s224 = scalar_lea.sflag [#allocation3], %s223
          %s225 = sand.u32 %s29, 1
          %s226 = smul.addr %s225, 16
          %s227 = scalar_lea.vmem [#allocation2], %s226
          %s229 = ssub.s32 256, 256
          %230 = vsyncadd %s224, %s229
          %s231 = smul.addr %s19, 2
          %s232 = smul.addr %s231, 128
          %s233 = scalar_lea.hbm %s0, %s232
          %s234 = sshll.u32 %s227, 4
          %s235 = int_to_ptr.vmem [resolvable:$true] %s234
          %240 = dma.hbm_to_vmem [thread:$0]  %s233, 256, %s235, %s224, 128, 128, 8
        $region40: #{tpu_custom_call.1} parent=35 // pred_fallthru
          _
      $region36: #{tpu_custom_call.1} parent=5 // pred_fallthru
        _
      %p241 = scmp.le.s32.totalorder 1, %s19
      %p242 = scmp.lt.s32.totalorder %s19, 9
      %p243 = pnand %p241, %p242
      %p244 = pneg %p243
      // Predicated region
      $region41: #{tpu_custom_call.1} parent=5 // pred_check
        _
      $region42: #{tpu_custom_call.1} parent=5 // pred_check_branch
        %246 = sbr.rel (%p243) target = $region44
      $region43: #{tpu_custom_call.1} parent=5 // pred_region
        %s247 = ssub.s32 %s19, 1
        %s248 = sand.u32 %s32, 1
        %s249 = scalar_lea.sflag [#allocation3], %s248
        %s250 = sand.u32 %s32, 1
        %s251 = smul.addr %s250, 16
        %s252 = scalar_lea.vmem [#allocation2], %s251
        // Predicated region
        $region45: #{tpu_custom_call.1} parent=43 // pred_check
          %p253 = pneg %p45
        $region46: #{tpu_custom_call.1} parent=43 // pred_check_branch
          %255 = sbr.rel (%p253) target = $region48
        $region47: #{tpu_custom_call.1} parent=43 // pred_region
          %256 = dma.done %s249, 256
        $region48: #{tpu_custom_call.1} parent=43 // pred_fallthru
          _
        // Predicated region
        $region49: #{tpu_custom_call.1} parent=43 // pred_check
          %p257 = pneg %p87
        $region50: #{tpu_custom_call.1} parent=43 // pred_check_branch
          %259 = sbr.rel (%p257) target = $region52
        $region51: #{tpu_custom_call.1} parent=43 // pred_region
          %260 = dma.done [#allocation6], 2048
        $region52: #{tpu_custom_call.1} parent=43 // pred_fallthru
          _
        %s261 = sand.u32 %s32, 1
        %s262 = scalar_lea.sflag [#allocation3], %s261
        %s263 = sand.u32 %s32, 1
        %s264 = smul.addr %s263, 16
        %s265 = scalar_lea.vmem [#allocation2], %s264
        %p266 = pneg %p45
        %p267 = pneg %p42
        %p268 = pneg %p66
        %p269 = pneg %p63
        %p270 = pneg %p87
        %p271 = pneg %p84
        %p272 = pneg %p108
        %p273 = pneg %p105
        %p274 = pneg %p129
        %p275 = pneg %p126
        %p276 = pneg %p150
        %p277 = pneg %p147
        %p278 = pneg %p176
        %p279 = pneg %p173
        %s280 = sand.u32 %s163, 1
        %s281 = scalar_lea.sflag [#allocation4], %s280
        %s282 = sand.u32 %s163, 1
        %s283 = smul.addr %s282, 2
        %s284 = scalar_lea.vmem [#allocation7], %s283
        %v285 = vld [vmem:[%s1] sm:$0xff]
        %v286 = vld [vmem:[%s1 + $0x8] sm:$0xff]
        %v287 = vld [vmem:[#allocation5] sm:$0xff]
        %v288 = vld [vmem:[#allocation5 + $0x8] sm:$0xff]
        %v289 = vld [vmem:[#allocation5 + $0x10] sm:$0xff]
        %v290 = vld [vmem:[#allocation5 + $0x18] sm:$0xff]
        %v291 = vld [vmem:[#allocation5 + $0x20] sm:$0xff]
        %v292 = vld [vmem:[#allocation5 + $0x28] sm:$0xff]
        %v293 = vld [vmem:[#allocation5 + $0x30] sm:$0xff]
        %v294 = vld [vmem:[#allocation5 + $0x38] sm:$0xff]
        %v295 = vld [vmem:[#allocation5 + $0x40] sm:$0xff]
        %v296 = vld [vmem:[#allocation5 + $0x48] sm:$0xff]
        %v297 = vld [vmem:[#allocation5 + $0x50] sm:$0xff]
        %v298 = vld [vmem:[#allocation5 + $0x58] sm:$0xff]
        %v299 = vld [vmem:[#allocation5 + $0x60] sm:$0xff]
        %v300 = vld [vmem:[#allocation5 + $0x68] sm:$0xff]
        %v301 = vld [vmem:[#allocation5 + $0x70] sm:$0xff]
        %v302 = vld [vmem:[#allocation5 + $0x78] sm:$0xff]
        %v303 = vld [vmem:[%s3] sm:$0x1]
        %v304 = vld [vmem:[%s252] sm:$0xff]
        %v305 = vld [vmem:[%s252 + $0x8] sm:$0xff]
        %vm306 = vcmask 130048
        %v308 = vsel %vm306, %v304, 0
        %v311 = vsel %vm306, %v305, 0
        %313 = vmatprep.subr.mxu0 0.0
        %314 = vmatpush1.msra.mxu0 0.0
        %315 = vmatprep.subr.mxu0 0.0
        %316 = vmatpush1.msra.mxu0 0.0
        %317 = vmatprep.subr.mxu0 0.0
        %318 = vmatpush1.msra.mxu0 0.0
        %319 = vmatprep.subr.mxu0 0.0
        %320 = vmatpush1.msra.mxu0 0.0
        %321 = vmatprep.subr.mxu0 0.0
        %322 = vmatpush1.msra.mxu0 0.0
        %323 = vmatprep.subr.mxu0 0.0
        %324 = vmatpush1.msra.mxu0 0.0
        %325 = vmatprep.subr.mxu0 0.0
        %326 = vmatpush1.msra.mxu0 0.0
        %327 = vmatprep.subr.mxu0 0.0
        %328 = vmatpush1.msra.mxu0 0.0
        %329 = vmatprep.subr.mxu0 0.0
        %330 = vmatpush1.msra.mxu0 0.0
        %331 = vmatprep.subr.mxu0 0.0
        %332 = vmatpush1.msra.mxu0 0.0
        %333 = vmatprep.subr.mxu0 0.0
        %334 = vmatpush1.msra.mxu0 0.0
        %335 = vmatprep.subr.mxu0 0.0
        %336 = vmatpush1.msra.mxu0 0.0
        %337 = vmatprep.subr.mxu0 0.0
        %338 = vmatpush1.msra.mxu0 0.0
        %339 = vmatprep.subr.mxu0 0.0
        %340 = vmatpush1.msra.mxu0 0.0
        %341 = vmatprep.subr.mxu0 0.0
        %342 = vmatpush1.msra.mxu0 %v286
        %343 = vmatprep.subr.mxu0 0.0
        %344 = vmatpush1.msra.mxu0 %v285
        %345 = vmatprep.subr.mxu0 0.0
        %346 = vmatpush2.msra.mxu0 0.0
        %347 = vmatprep.subr.mxu0 0.0
        %348 = vmatpush2.msra.mxu0 0.0
        %349 = vmatprep.subr.mxu0 0.0
        %350 = vmatpush2.msra.mxu0 0.0
        %351 = vmatprep.subr.mxu0 0.0
        %352 = vmatpush2.msra.mxu0 0.0
        %353 = vmatprep.subr.mxu0 0.0
        %354 = vmatpush2.msra.mxu0 0.0
        %355 = vmatprep.subr.mxu0 0.0
        %356 = vmatpush2.msra.mxu0 0.0
        %357 = vmatprep.subr.mxu0 0.0
        %358 = vmatpush2.msra.mxu0 0.0
        %359 = vmatprep.subr.mxu0 0.0
        %360 = vmatpush2.msra.mxu0 0.0
        %361 = vmatprep.subr.mxu0 0.0
        %362 = vmatpush2.msra.mxu0 0.0
        %363 = vmatprep.subr.mxu0 0.0
        %364 = vmatpush2.msra.mxu0 0.0
        %365 = vmatprep.subr.mxu0 0.0
        %366 = vmatpush2.msra.mxu0 0.0
        %367 = vmatprep.subr.mxu0 0.0
        %368 = vmatpush2.msra.mxu0 0.0
        %369 = vmatprep.subr.mxu0 0.0
        %370 = vmatpush2.msra.mxu0 0.0
        %371 = vmatprep.subr.mxu0 0.0
        %372 = vmatpush2.msra.mxu0 0.0
        %373 = vmatprep.subr.mxu0 0.0
        %374 = vmatpush2.msra.mxu0 0.0
        %375 = vmatprep.subr.mxu0 0.0
        %376 = vmatpush2.msra.mxu0 0.0
        %377 = vmatprep.mubr.f32.mxu0 0.0
        %378 = vmatmul.mubr.f32.gmra.mxu0 %v308
        %v379 = vpop.f32.mrf.mxu0
        %v380 = vadd.f32 0.0, %v379
        %v381 = vpop.f32.mrf.mxu0
        %382 = vmatprep.mubr.f32.mxu0 0.0
        %383 = vmatmul.mubr.f32.gmra.mxu0 %v311
        %v384 = vpop.f32.mrf.mxu0
        %v385 = vadd.f32 0.0, %v384
        %v386 = vpop.f32.mrf.mxu0
        %387 = vdwg.mxu0
        %v388 = vxor.u32 %v380, 2147483648
        %v389 = vmul.f32 %v388, 1.442695
        %v390 = vpow.pop %v389
        %v391 = vadd.f32 %v390, 1.0
        %v392 = vrcp.pop %v391
        %v393 = vmul.f32 1.0, %v392
        %v394 = vtanh.pop %v380
        %v395 = vmul.f32 %v393, 0.0
        %397 = vrot.lane.b32.xlu0 %v394, 64
        %v398 = vpop.permute.xlu0 %397
        %v400 = vmul.f32 %v393, %v398
        %402 = vrot.lane.b32.xlu0 %v400, 32
        %v403 = vpop.permute.xlu0 %402
        %v405 = vadd.f32 %v395, %v403
        %v406 = vtanh.pop %v405
        %408 = vrot.lane.b32.xlu0 %v406, 64
        %v409 = vpop.permute.xlu0 %408
        %v411 = vmul.f32 %v393, %v409
        %413 = vrot.lane.b32.xlu0 %v411, 32
        %v414 = vpop.permute.xlu0 %413
        %vm416 = vcmask 261120
        %v417 = vsel %vm416, %v414, 0.0
        %vm418 = vcmask 523264
        %v420 = vsel %vm418, %v417, 0
        %422 = vmatprep.subr.mxu0 0.0
        %423 = vmatpush1.msra.mxu0 0.0
        %424 = vmatprep.subr.mxu0 0.0
        %425 = vmatpush1.msra.mxu0 0.0
        %426 = vmatprep.subr.mxu0 0.0
        %427 = vmatpush1.msra.mxu0 0.0
        %428 = vmatprep.subr.mxu0 0.0
        %429 = vmatpush1.msra.mxu0 0.0
        %430 = vmatprep.subr.mxu0 0.0
        %431 = vmatpush1.msra.mxu0 0.0
        %432 = vmatprep.subr.mxu0 0.0
        %433 = vmatpush1.msra.mxu0 0.0
        %434 = vmatprep.subr.mxu0 0.0
        %435 = vmatpush1.msra.mxu0 0.0
        %436 = vmatprep.subr.mxu0 0.0
        %437 = vmatpush1.msra.mxu0 0.0
        %438 = vmatprep.subr.mxu0 %v302
        %439 = vmatpush1.msra.mxu0 %v301
        %440 = vmatprep.subr.mxu0 %v300
        %441 = vmatpush1.msra.mxu0 %v299
        %442 = vmatprep.subr.mxu0 %v298
        %443 = vmatpush1.msra.mxu0 %v297
        %444 = vmatprep.subr.mxu0 %v296
        %445 = vmatpush1.msra.mxu0 %v295
        %446 = vmatprep.subr.mxu0 %v294
        %447 = vmatpush1.msra.mxu0 %v293
        %448 = vmatprep.subr.mxu0 %v292
        %449 = vmatpush1.msra.mxu0 %v291
        %450 = vmatprep.subr.mxu0 %v290
        %451 = vmatpush1.msra.mxu0 %v289
        %452 = vmatprep.subr.mxu0 %v288
        %453 = vmatpush1.msra.mxu0 %v287
        %454 = vmatprep.subr.mxu0 0.0
        %455 = vmatpush2.msra.mxu0 0.0
        %456 = vmatprep.subr.mxu0 0.0
        %457 = vmatpush2.msra.mxu0 0.0
        %458 = vmatprep.subr.mxu0 0.0
        %459 = vmatpush2.msra.mxu0 0.0
        %460 = vmatprep.subr.mxu0 0.0
        %461 = vmatpush2.msra.mxu0 0.0
        %462 = vmatprep.subr.mxu0 0.0
        %463 = vmatpush2.msra.mxu0 0.0
        %464 = vmatprep.subr.mxu0 0.0
        %465 = vmatpush2.msra.mxu0 0.0
        %466 = vmatprep.subr.mxu0 0.0
        %467 = vmatpush2.msra.mxu0 0.0
        %468 = vmatprep.subr.mxu0 0.0
        %469 = vmatpush2.msra.mxu0 0.0
        %470 = vmatprep.subr.mxu0 0.0
        %471 = vmatpush2.msra.mxu0 0.0
        %472 = vmatprep.subr.mxu0 0.0
        %473 = vmatpush2.msra.mxu0 0.0
        %474 = vmatprep.subr.mxu0 0.0
        %475 = vmatpush2.msra.mxu0 0.0
        %476 = vmatprep.subr.mxu0 0.0
        %477 = vmatpush2.msra.mxu0 0.0
        %478 = vmatprep.subr.mxu0 0.0
        %479 = vmatpush2.msra.mxu0 0.0
        %480 = vmatprep.subr.mxu0 0.0
        %481 = vmatpush2.msra.mxu0 0.0
        %482 = vmatprep.subr.mxu0 0.0
        %483 = vmatpush2.msra.mxu0 0.0
        %484 = vmatprep.subr.mxu0 0.0
        %485 = vmatpush2.msra.mxu0 0.0
        %486 = vmatprep.mubr.f32.mxu0 0.0
        %487 = vmatmul.mubr.f32.gmra.mxu0 %v420
        %v488 = vpop.f32.mrf.mxu0
        %v489 = vadd.f32 0.0, %v488
        %v490 = vpop.f32.mrf.mxu0
        %v491 = vadd.f32 0.0, %v490
        %492 = vdwg.mxu0
        %v494 = vrot.slane %v489, 6
        %v496 = vadd.f32 %v380, %v494
        %v498 = vlaneseq
        %v499 = vshrl.u32 %v498, 7
        %v500 = vsub.s32 0, %v499
        %v501 = vrot.slane %v303, %v500
        %v503 = vadd.f32 %v491, %v501
        %v504 = vxor.u32 %v496, 2147483648
        %v505 = vmul.f32 %v504, 1.442695
        %v506 = vpow.pop %v505
        %v507 = vadd.f32 %v506, 1.0
        %v508 = vrcp.pop %v507
        %v509 = vmul.f32 1.0, %v508
        %v510 = vtanh.pop %v496
        %v512 = vrot.slane %v405, 6
        %v514 = vmul.f32 %v509, %v512
        %516 = vrot.lane.b32.xlu0 %v510, 64
        %v517 = vpop.permute.xlu0 %516
        %v519 = vmul.f32 %v509, %v517
        %521 = vrot.lane.b32.xlu0 %v519, 32
        %v522 = vpop.permute.xlu0 %521
        %v524 = vadd.f32 %v514, %v522
        %v525 = vtanh.pop %v524
        %527 = vrot.lane.b32.xlu0 %v525, 64
        %v528 = vpop.permute.xlu0 %527
        %v530 = vmul.f32 %v509, %v528
        %v531 = vxor.u32 %v503, 2147483648
        %v532 = vmul.f32 %v531, 1.442695
        %v533 = vpow.pop %v532
        %v534 = vadd.f32 %v533, 1.0
        %v535 = vrcp.pop %v534
        %v536 = vmul.f32 1.0, %v535
        %v537 = vtanh.pop %v503
        %v538 = vmul.f32 %v536, 0.0
        %540 = vrot.lane.b32.xlu0 %v537, 64
        %v541 = vpop.permute.xlu0 %540
        %v543 = vmul.f32 %v536, %v541
        %545 = vrot.lane.b32.xlu0 %v543, 32
        %v546 = vpop.permute.xlu0 %545
        %v548 = vadd.f32 %v538, %v546
        %v549 = vtanh.pop %v548
        %551 = vrot.lane.b32.xlu0 %v549, 64
        %v552 = vpop.permute.xlu0 %551
        %v554 = vmul.f32 %v536, %v552
        %556 = vrot.lane.b32.xlu0 %v530, 32
        %v557 = vpop.permute.xlu0 %556
        %v560 = vrot.slane %v554, 6
        %561 = vrot.lane.b32.xlu0 %v560, 64
        %v562 = vpop.permute.xlu0 %561
        %v564 = vsel %vm416, %v557, %v562
        %v566 = vrot.slane %v564, 2
        %v567 = vsel %vm418, %v566, 0
        %569 = vmatprep.subr.mxu0 0.0
        %570 = vmatpush1.msra.mxu0 0.0
        %571 = vmatprep.subr.mxu0 0.0
        %572 = vmatpush1.msra.mxu0 0.0
        %573 = vmatprep.subr.mxu0 0.0
        %574 = vmatpush1.msra.mxu0 0.0
        %575 = vmatprep.subr.mxu0 0.0
        %576 = vmatpush1.msra.mxu0 0.0
        %577 = vmatprep.subr.mxu0 0.0
        %578 = vmatpush1.msra.mxu0 0.0
        %579 = vmatprep.subr.mxu0 0.0
        %580 = vmatpush1.msra.mxu0 0.0
        %581 = vmatprep.subr.mxu0 0.0
        %582 = vmatpush1.msra.mxu0 0.0
        %583 = vmatprep.subr.mxu0 0.0
        %584 = vmatpush1.msra.mxu0 0.0
        %585 = vmatprep.subr.mxu0 %v302
        %586 = vmatpush1.msra.mxu0 %v301
        %587 = vmatprep.subr.mxu0 %v300
        %588 = vmatpush1.msra.mxu0 %v299
        %589 = vmatprep.subr.mxu0 %v298
        %590 = vmatpush1.msra.mxu0 %v297
        %591 = vmatprep.subr.mxu0 %v296
        %592 = vmatpush1.msra.mxu0 %v295
        %593 = vmatprep.subr.mxu0 %v294
        %594 = vmatpush1.msra.mxu0 %v293
        %595 = vmatprep.subr.mxu0 %v292
        %596 = vmatpush1.msra.mxu0 %v291
        %597 = vmatprep.subr.mxu0 %v290
        %598 = vmatpush1.msra.mxu0 %v289
        %599 = vmatprep.subr.mxu0 %v288
        %600 = vmatpush1.msra.mxu0 %v287
        %601 = vmatprep.subr.mxu0 0.0
        %602 = vmatpush2.msra.mxu0 0.0
        %603 = vmatprep.subr.mxu0 0.0
        %604 = vmatpush2.msra.mxu0 0.0
        %605 = vmatprep.subr.mxu0 0.0
        %606 = vmatpush2.msra.mxu0 0.0
        %607 = vmatprep.subr.mxu0 0.0
        %608 = vmatpush2.msra.mxu0 0.0
        %609 = vmatprep.subr.mxu0 0.0
        %610 = vmatpush2.msra.mxu0 0.0
        %611 = vmatprep.subr.mxu0 0.0
        %612 = vmatpush2.msra.mxu0 0.0
        %613 = vmatprep.subr.mxu0 0.0
        %614 = vmatpush2.msra.mxu0 0.0
        %615 = vmatprep.subr.mxu0 0.0
        %616 = vmatpush2.msra.mxu0 0.0
        %617 = vmatprep.subr.mxu0 0.0
        %618 = vmatpush2.msra.mxu0 0.0
        %619 = vmatprep.subr.mxu0 0.0
        %620 = vmatpush2.msra.mxu0 0.0
        %621 = vmatprep.subr.mxu0 0.0
        %622 = vmatpush2.msra.mxu0 0.0
        %623 = vmatprep.subr.mxu0 0.0
        %624 = vmatpush2.msra.mxu0 0.0
        %625 = vmatprep.subr.mxu0 0.0
        %626 = vmatpush2.msra.mxu0 0.0
        %627 = vmatprep.subr.mxu0 0.0
        %628 = vmatpush2.msra.mxu0 0.0
        %629 = vmatprep.subr.mxu0 0.0
        %630 = vmatpush2.msra.mxu0 0.0
        %631 = vmatprep.subr.mxu0 0.0
        %632 = vmatpush2.msra.mxu0 0.0
        %633 = vmatprep.mubr.f32.mxu0 0.0
        %634 = vmatmul.mubr.f32.gmra.mxu0 %v567
        %v635 = vpop.f32.mrf.mxu0
        %v636 = vadd.f32 0.0, %v635
        %v637 = vpop.f32.mrf.mxu0
        %v638 = vadd.f32 0.0, %v637
        %639 = vdwg.mxu0
        %v641 = vrot.slane %v636, 4
        %v643 = vadd.f32 %v380, %v641
        %v644 = vadd.f32 %v638, %v501
        %v645 = vxor.u32 %v643, 2147483648
        %v646 = vmul.f32 %v645, 1.442695
        %v647 = vpow.pop %v646
        %v648 = vadd.f32 %v647, 1.0
        %v649 = vrcp.pop %v648
        %v650 = vmul.f32 1.0, %v649
        %v651 = vtanh.pop %v643
        %v653 = vrot.slane %v524, 6
        %v655 = vmul.f32 %v650, %v653
        %657 = vrot.lane.b32.xlu0 %v651, 64
        %v658 = vpop.permute.xlu0 %657
        %v660 = vmul.f32 %v650, %v658
        %662 = vrot.lane.b32.xlu0 %v660, 32
        %v663 = vpop.permute.xlu0 %662
        %v665 = vadd.f32 %v655, %v663
        %v666 = vtanh.pop %v665
        %668 = vrot.lane.b32.xlu0 %v666, 64
        %v669 = vpop.permute.xlu0 %668
        %v671 = vmul.f32 %v650, %v669
        %v672 = vxor.u32 %v644, 2147483648
        %v673 = vmul.f32 %v672, 1.442695
        %v674 = vpow.pop %v673
        %v675 = vadd.f32 %v674, 1.0
        %v676 = vrcp.pop %v675
        %v677 = vmul.f32 1.0, %v676
        %v678 = vtanh.pop %v644
        %v679 = vmul.f32 %v677, %v548
        %681 = vrot.lane.b32.xlu0 %v678, 64
        %v682 = vpop.permute.xlu0 %681
        %v684 = vmul.f32 %v677, %v682
        %686 = vrot.lane.b32.xlu0 %v684, 32
        %v687 = vpop.permute.xlu0 %686
        %v689 = vadd.f32 %v679, %v687
        %v690 = vtanh.pop %v689
        %692 = vrot.lane.b32.xlu0 %v690, 64
        %v693 = vpop.permute.xlu0 %692
        %v695 = vmul.f32 %v677, %v693
        %697 = vrot.lane.b32.xlu0 %v671, 32
        %v698 = vpop.permute.xlu0 %697
        %v701 = vrot.slane %v695, 4
        %702 = vrot.lane.b32.xlu0 %v701, 64
        %v703 = vpop.permute.xlu0 %702
        %v705 = vsel %vm416, %v698, %v703
        %v707 = vrot.slane %v705, 4
        %v708 = vsel %vm418, %v707, 0
        %710 = vmatprep.subr.mxu0 0.0
        %711 = vmatpush1.msra.mxu0 0.0
        %712 = vmatprep.subr.mxu0 0.0
        %713 = vmatpush1.msra.mxu0 0.0
        %714 = vmatprep.subr.mxu0 0.0
        %715 = vmatpush1.msra.mxu0 0.0
        %716 = vmatprep.subr.mxu0 0.0
        %717 = vmatpush1.msra.mxu0 0.0
        %718 = vmatprep.subr.mxu0 0.0
        %719 = vmatpush1.msra.mxu0 0.0
        %720 = vmatprep.subr.mxu0 0.0
        %721 = vmatpush1.msra.mxu0 0.0
        %722 = vmatprep.subr.mxu0 0.0
        %723 = vmatpush1.msra.mxu0 0.0
        %724 = vmatprep.subr.mxu0 0.0
        %725 = vmatpush1.msra.mxu0 0.0
        %726 = vmatprep.subr.mxu0 %v302
        %727 = vmatpush1.msra.mxu0 %v301
        %728 = vmatprep.subr.mxu0 %v300
        %729 = vmatpush1.msra.mxu0 %v299
        %730 = vmatprep.subr.mxu0 %v298
        %731 = vmatpush1.msra.mxu0 %v297
        %732 = vmatprep.subr.mxu0 %v296
        %733 = vmatpush1.msra.mxu0 %v295
        %734 = vmatprep.subr.mxu0 %v294
        %735 = vmatpush1.msra.mxu0 %v293
        %736 = vmatprep.subr.mxu0 %v292
        %737 = vmatpush1.msra.mxu0 %v291
        %738 = vmatprep.subr.mxu0 %v290
        %739 = vmatpush1.msra.mxu0 %v289
        %740 = vmatprep.subr.mxu0 %v288
        %741 = vmatpush1.msra.mxu0 %v287
        %742 = vmatprep.subr.mxu0 0.0
        %743 = vmatpush2.msra.mxu0 0.0
        %744 = vmatprep.subr.mxu0 0.0
        %745 = vmatpush2.msra.mxu0 0.0
        %746 = vmatprep.subr.mxu0 0.0
        %747 = vmatpush2.msra.mxu0 0.0
        %748 = vmatprep.subr.mxu0 0.0
        %749 = vmatpush2.msra.mxu0 0.0
        %750 = vmatprep.subr.mxu0 0.0
        %751 = vmatpush2.msra.mxu0 0.0
        %752 = vmatprep.subr.mxu0 0.0
        %753 = vmatpush2.msra.mxu0 0.0
        %754 = vmatprep.subr.mxu0 0.0
        %755 = vmatpush2.msra.mxu0 0.0
        %756 = vmatprep.subr.mxu0 0.0
        %757 = vmatpush2.msra.mxu0 0.0
        %758 = vmatprep.subr.mxu0 0.0
        %759 = vmatpush2.msra.mxu0 0.0
        %760 = vmatprep.subr.mxu0 0.0
        %761 = vmatpush2.msra.mxu0 0.0
        %762 = vmatprep.subr.mxu0 0.0
        %763 = vmatpush2.msra.mxu0 0.0
        %764 = vmatprep.subr.mxu0 0.0
        %765 = vmatpush2.msra.mxu0 0.0
        %766 = vmatprep.subr.mxu0 0.0
        %767 = vmatpush2.msra.mxu0 0.0
        %768 = vmatprep.subr.mxu0 0.0
        %769 = vmatpush2.msra.mxu0 0.0
        %770 = vmatprep.subr.mxu0 0.0
        %771 = vmatpush2.msra.mxu0 0.0
        %772 = vmatprep.subr.mxu0 0.0
        %773 = vmatpush2.msra.mxu0 0.0
        %774 = vmatprep.mubr.f32.mxu0 0.0
        %775 = vmatmul.mubr.f32.gmra.mxu0 %v708
        %v776 = vpop.f32.mrf.mxu0
        %v777 = vadd.f32 0.0, %v776
        %v778 = vpop.f32.mrf.mxu0
        %v779 = vadd.f32 0.0, %v778
        %780 = vdwg.mxu0
        %v782 = vrot.slane %v777, 2
        %v784 = vadd.f32 %v380, %v782
        %v785 = vadd.f32 %v779, %v501
        %v786 = vxor.u32 %v784, 2147483648
        %v787 = vmul.f32 %v786, 1.442695
        %v788 = vpow.pop %v787
        %v789 = vadd.f32 %v788, 1.0
        %v790 = vrcp.pop %v789
        %v791 = vmul.f32 1.0, %v790
        %v792 = vtanh.pop %v784
        %v794 = vrot.slane %v665, 6
        %v796 = vmul.f32 %v791, %v794
        %798 = vrot.lane.b32.xlu0 %v792, 64
        %v799 = vpop.permute.xlu0 %798
        %v801 = vmul.f32 %v791, %v799
        %803 = vrot.lane.b32.xlu0 %v801, 32
        %v804 = vpop.permute.xlu0 %803
        %v806 = vadd.f32 %v796, %v804
        %v807 = vtanh.pop %v806
        %809 = vrot.lane.b32.xlu0 %v807, 64
        %v810 = vpop.permute.xlu0 %809
        %v812 = vmul.f32 %v791, %v810
        %v813 = vxor.u32 %v785, 2147483648
        %v814 = vmul.f32 %v813, 1.442695
        %v815 = vpow.pop %v814
        %v816 = vadd.f32 %v815, 1.0
        %v817 = vrcp.pop %v816
        %v818 = vmul.f32 1.0, %v817
        %v819 = vtanh.pop %v785
        %v820 = vmul.f32 %v818, %v689
        %822 = vrot.lane.b32.xlu0 %v819, 64
        %v823 = vpop.permute.xlu0 %822
        %v825 = vmul.f32 %v818, %v823
        %827 = vrot.lane.b32.xlu0 %v825, 32
        %v828 = vpop.permute.xlu0 %827
        %v830 = vadd.f32 %v820, %v828
        %v831 = vtanh.pop %v830
        %833 = vrot.lane.b32.xlu0 %v831, 64
        %v834 = vpop.permute.xlu0 %833
        %v836 = vmul.f32 %v818, %v834
        %838 = vrot.lane.b32.xlu0 %v812, 32
        %v839 = vpop.permute.xlu0 %838
        %v842 = vrot.slane %v836, 2
        %843 = vrot.lane.b32.xlu0 %v842, 64
        %v844 = vpop.permute.xlu0 %843
        %v846 = vsel %vm416, %v839, %v844
        %v848 = vrot.slane %v846, 6
        %v849 = vsel %vm418, %v848, 0
        %851 = vmatprep.subr.mxu0 0.0
        %852 = vmatpush1.msra.mxu0 0.0
        %853 = vmatprep.subr.mxu0 0.0
        %854 = vmatpush1.msra.mxu0 0.0
        %855 = vmatprep.subr.mxu0 0.0
        %856 = vmatpush1.msra.mxu0 0.0
        %857 = vmatprep.subr.mxu0 0.0
        %858 = vmatpush1.msra.mxu0 0.0
        %859 = vmatprep.subr.mxu0 0.0
        %860 = vmatpush1.msra.mxu0 0.0
        %861 = vmatprep.subr.mxu0 0.0
        %862 = vmatpush1.msra.mxu0 0.0
        %863 = vmatprep.subr.mxu0 0.0
        %864 = vmatpush1.msra.mxu0 0.0
        %865 = vmatprep.subr.mxu0 0.0
        %866 = vmatpush1.msra.mxu0 0.0
        %867 = vmatprep.subr.mxu0 %v302
        %868 = vmatpush1.msra.mxu0 %v301
        %869 = vmatprep.subr.mxu0 %v300
        %870 = vmatpush1.msra.mxu0 %v299
        %871 = vmatprep.subr.mxu0 %v298
        %872 = vmatpush1.msra.mxu0 %v297
        %873 = vmatprep.subr.mxu0 %v296
        %874 = vmatpush1.msra.mxu0 %v295
        %875 = vmatprep.subr.mxu0 %v294
        %876 = vmatpush1.msra.mxu0 %v293
        %877 = vmatprep.subr.mxu0 %v292
        %878 = vmatpush1.msra.mxu0 %v291
        %879 = vmatprep.subr.mxu0 %v290
        %880 = vmatpush1.msra.mxu0 %v289
        %881 = vmatprep.subr.mxu0 %v288
        %882 = vmatpush1.msra.mxu0 %v287
        %883 = vmatprep.subr.mxu0 0.0
        %884 = vmatpush2.msra.mxu0 0.0
        %885 = vmatprep.subr.mxu0 0.0
        %886 = vmatpush2.msra.mxu0 0.0
        %887 = vmatprep.subr.mxu0 0.0
        %888 = vmatpush2.msra.mxu0 0.0
        %889 = vmatprep.subr.mxu0 0.0
        %890 = vmatpush2.msra.mxu0 0.0
        %891 = vmatprep.subr.mxu0 0.0
        %892 = vmatpush2.msra.mxu0 0.0
        %893 = vmatprep.subr.mxu0 0.0
        %894 = vmatpush2.msra.mxu0 0.0
        %895 = vmatprep.subr.mxu0 0.0
        %896 = vmatpush2.msra.mxu0 0.0
        %897 = vmatprep.subr.mxu0 0.0
        %898 = vmatpush2.msra.mxu0 0.0
        %899 = vmatprep.subr.mxu0 0.0
        %900 = vmatpush2.msra.mxu0 0.0
        %901 = vmatprep.subr.mxu0 0.0
        %902 = vmatpush2.msra.mxu0 0.0
        %903 = vmatprep.subr.mxu0 0.0
        %904 = vmatpush2.msra.mxu0 0.0
        %905 = vmatprep.subr.mxu0 0.0
        %906 = vmatpush2.msra.mxu0 0.0
        %907 = vmatprep.subr.mxu0 0.0
        %908 = vmatpush2.msra.mxu0 0.0
        %909 = vmatprep.subr.mxu0 0.0
        %910 = vmatpush2.msra.mxu0 0.0
        %911 = vmatprep.subr.mxu0 0.0
        %912 = vmatpush2.msra.mxu0 0.0
        %913 = vmatprep.subr.mxu0 0.0
        %914 = vmatpush2.msra.mxu0 0.0
        %915 = vmatprep.mubr.f32.mxu0 0.0
        %916 = vmatmul.mubr.f32.gmra.mxu0 %v849
        %v917 = vpop.f32.mrf.mxu0
        %v918 = vadd.f32 0.0, %v917
        %v919 = vpop.f32.mrf.mxu0
        %v920 = vadd.f32 0.0, %v919
        %921 = vdwg.mxu0
        %v922 = vadd.f32 %v385, %v918
        %v923 = vadd.f32 %v920, %v501
        %v924 = vxor.u32 %v922, 2147483648
        %v925 = vmul.f32 %v924, 1.442695
        %v926 = vpow.pop %v925
        %v927 = vadd.f32 %v926, 1.0
        %v928 = vrcp.pop %v927
        %v929 = vmul.f32 1.0, %v928
        %v930 = vtanh.pop %v922
        %v932 = vrot.slane %v806, 6
        %v934 = vmul.f32 %v929, %v932
        %936 = vrot.lane.b32.xlu0 %v930, 64
        %v937 = vpop.permute.xlu0 %936
        %v939 = vmul.f32 %v929, %v937
        %941 = vrot.lane.b32.xlu0 %v939, 32
        %v942 = vpop.permute.xlu0 %941
        %v944 = vadd.f32 %v934, %v942
        %v945 = vtanh.pop %v944
        %947 = vrot.lane.b32.xlu0 %v945, 64
        %v948 = vpop.permute.xlu0 %947
        %v950 = vmul.f32 %v929, %v948
        %v951 = vxor.u32 %v923, 2147483648
        %v952 = vmul.f32 %v951, 1.442695
        %v953 = vpow.pop %v952
        %v954 = vadd.f32 %v953, 1.0
        %v955 = vrcp.pop %v954
        %v956 = vmul.f32 1.0, %v955
        %v957 = vtanh.pop %v923
        %v958 = vmul.f32 %v956, %v830
        %960 = vrot.lane.b32.xlu0 %v957, 64
        %v961 = vpop.permute.xlu0 %960
        %v963 = vmul.f32 %v956, %v961
        %965 = vrot.lane.b32.xlu0 %v963, 32
        %v966 = vpop.permute.xlu0 %965
        %v968 = vadd.f32 %v958, %v966
        %v969 = vtanh.pop %v968
        %971 = vrot.lane.b32.xlu0 %v969, 64
        %v972 = vpop.permute.xlu0 %971
        %v974 = vmul.f32 %v956, %v972
        %976 = vrot.lane.b32.xlu0 %v950, 32
        %v977 = vpop.permute.xlu0 %976
        %980 = vrot.lane.b32.xlu0 %v974, 64
        %v981 = vpop.permute.xlu0 %980
        %v983 = vsel %vm416, %v977, %v981
        %v985 = vsel %vm418, %v983, 0
        %987 = vmatprep.subr.mxu0 0.0
        %988 = vmatpush1.msra.mxu0 0.0
        %989 = vmatprep.subr.mxu0 0.0
        %990 = vmatpush1.msra.mxu0 0.0
        %991 = vmatprep.subr.mxu0 0.0
        %992 = vmatpush1.msra.mxu0 0.0
        %993 = vmatprep.subr.mxu0 0.0
        %994 = vmatpush1.msra.mxu0 0.0
        %995 = vmatprep.subr.mxu0 0.0
        %996 = vmatpush1.msra.mxu0 0.0
        %997 = vmatprep.subr.mxu0 0.0
        %998 = vmatpush1.msra.mxu0 0.0
        %999 = vmatprep.subr.mxu0 0.0
        %1000 = vmatpush1.msra.mxu0 0.0
        %1001 = vmatprep.subr.mxu0 0.0
        %1002 = vmatpush1.msra.mxu0 0.0
        %1003 = vmatprep.subr.mxu0 %v302
        %1004 = vmatpush1.msra.mxu0 %v301
        %1005 = vmatprep.subr.mxu0 %v300
        %1006 = vmatpush1.msra.mxu0 %v299
        %1007 = vmatprep.subr.mxu0 %v298
        %1008 = vmatpush1.msra.mxu0 %v297
        %1009 = vmatprep.subr.mxu0 %v296
        %1010 = vmatpush1.msra.mxu0 %v295
        %1011 = vmatprep.subr.mxu0 %v294
        %1012 = vmatpush1.msra.mxu0 %v293
        %1013 = vmatprep.subr.mxu0 %v292
        %1014 = vmatpush1.msra.mxu0 %v291
        %1015 = vmatprep.subr.mxu0 %v290
        %1016 = vmatpush1.msra.mxu0 %v289
        %1017 = vmatprep.subr.mxu0 %v288
        %1018 = vmatpush1.msra.mxu0 %v287
        %1019 = vmatprep.subr.mxu0 0.0
        %1020 = vmatpush2.msra.mxu0 0.0
        %1021 = vmatprep.subr.mxu0 0.0
        %1022 = vmatpush2.msra.mxu0 0.0
        %1023 = vmatprep.subr.mxu0 0.0
        %1024 = vmatpush2.msra.mxu0 0.0
        %1025 = vmatprep.subr.mxu0 0.0
        %1026 = vmatpush2.msra.mxu0 0.0
        %1027 = vmatprep.subr.mxu0 0.0
        %1028 = vmatpush2.msra.mxu0 0.0
        %1029 = vmatprep.subr.mxu0 0.0
        %1030 = vmatpush2.msra.mxu0 0.0
        %1031 = vmatprep.subr.mxu0 0.0
        %1032 = vmatpush2.msra.mxu0 0.0
        %1033 = vmatprep.subr.mxu0 0.0
        %1034 = vmatpush2.msra.mxu0 0.0
        %1035 = vmatprep.subr.mxu0 0.0
        %1036 = vmatpush2.msra.mxu0 0.0
        %1037 = vmatprep.subr.mxu0 0.0
        %1038 = vmatpush2.msra.mxu0 0.0
        %1039 = vmatprep.subr.mxu0 0.0
        %1040 = vmatpush2.msra.mxu0 0.0
        %1041 = vmatprep.subr.mxu0 0.0
        %1042 = vmatpush2.msra.mxu0 0.0
        %1043 = vmatprep.subr.mxu0 0.0
        %1044 = vmatpush2.msra.mxu0 0.0
        %1045 = vmatprep.subr.mxu0 0.0
        %1046 = vmatpush2.msra.mxu0 0.0
        %1047 = vmatprep.subr.mxu0 0.0
        %1048 = vmatpush2.msra.mxu0 0.0
        %1049 = vmatprep.subr.mxu0 0.0
        %1050 = vmatpush2.msra.mxu0 0.0
        %1051 = vmatprep.mubr.f32.mxu0 0.0
        %1052 = vmatmul.mubr.f32.gmra.mxu0 %v985
        %v1053 = vpop.f32.mrf.mxu0
        %v1054 = vadd.f32 0.0, %v1053
        %v1055 = vpop.f32.mrf.mxu0
        %v1056 = vadd.f32 0.0, %v1055
        %1057 = vdwg.mxu0
        %v1059 = vrot.slane %v1054, 6
        %v1061 = vadd.f32 %v385, %v1059
        %v1062 = vadd.f32 %v1056, %v501
        %v1063 = vxor.u32 %v1061, 2147483648
        %v1064 = vmul.f32 %v1063, 1.442695
        %v1065 = vpow.pop %v1064
        %v1066 = vadd.f32 %v1065, 1.0
        %v1067 = vrcp.pop %v1066
        %v1068 = vmul.f32 1.0, %v1067
        %v1069 = vtanh.pop %v1061
        %v1071 = vrot.slane %v944, 6
        %v1073 = vmul.f32 %v1068, %v1071
        %1075 = vrot.lane.b32.xlu0 %v1069, 64
        %v1076 = vpop.permute.xlu0 %1075
        %v1078 = vmul.f32 %v1068, %v1076
        %1080 = vrot.lane.b32.xlu0 %v1078, 32
        %v1081 = vpop.permute.xlu0 %1080
        %v1083 = vadd.f32 %v1073, %v1081
        %v1084 = vtanh.pop %v1083
        %1086 = vrot.lane.b32.xlu0 %v1084, 64
        %v1087 = vpop.permute.xlu0 %1086
        %v1089 = vmul.f32 %v1068, %v1087
        %v1090 = vxor.u32 %v1062, 2147483648
        %v1091 = vmul.f32 %v1090, 1.442695
        %v1092 = vpow.pop %v1091
        %v1093 = vadd.f32 %v1092, 1.0
        %v1094 = vrcp.pop %v1093
        %v1095 = vmul.f32 1.0, %v1094
        %v1096 = vtanh.pop %v1062
        %v1097 = vmul.f32 %v1095, %v968
        %1099 = vrot.lane.b32.xlu0 %v1096, 64
        %v1100 = vpop.permute.xlu0 %1099
        %v1102 = vmul.f32 %v1095, %v1100
        %1104 = vrot.lane.b32.xlu0 %v1102, 32
        %v1105 = vpop.permute.xlu0 %1104
        %v1107 = vadd.f32 %v1097, %v1105
        %v1108 = vtanh.pop %v1107
        %1110 = vrot.lane.b32.xlu0 %v1108, 64
        %v1111 = vpop.permute.xlu0 %1110
        %v1113 = vmul.f32 %v1095, %v1111
        %1115 = vrot.lane.b32.xlu0 %v1089, 32
        %v1116 = vpop.permute.xlu0 %1115
        %v1119 = vrot.slane %v1113, 6
        %1120 = vrot.lane.b32.xlu0 %v1119, 64
        %v1121 = vpop.permute.xlu0 %1120
        %v1123 = vsel %vm416, %v1116, %v1121
        %v1125 = vrot.slane %v1123, 2
        %v1126 = vsel %vm418, %v1125, 0
        %1128 = vmatprep.subr.mxu0 0.0
        %1129 = vmatpush1.msra.mxu0 0.0
        %1130 = vmatprep.subr.mxu0 0.0
        %1131 = vmatpush1.msra.mxu0 0.0
        %1132 = vmatprep.subr.mxu0 0.0
        %1133 = vmatpush1.msra.mxu0 0.0
        %1134 = vmatprep.subr.mxu0 0.0
        %1135 = vmatpush1.msra.mxu0 0.0
        %1136 = vmatprep.subr.mxu0 0.0
        %1137 = vmatpush1.msra.mxu0 0.0
        %1138 = vmatprep.subr.mxu0 0.0
        %1139 = vmatpush1.msra.mxu0 0.0
        %1140 = vmatprep.subr.mxu0 0.0
        %1141 = vmatpush1.msra.mxu0 0.0
        %1142 = vmatprep.subr.mxu0 0.0
        %1143 = vmatpush1.msra.mxu0 0.0
        %1144 = vmatprep.subr.mxu0 %v302
        %1145 = vmatpush1.msra.mxu0 %v301
        %1146 = vmatprep.subr.mxu0 %v300
        %1147 = vmatpush1.msra.mxu0 %v299
        %1148 = vmatprep.subr.mxu0 %v298
        %1149 = vmatpush1.msra.mxu0 %v297
        %1150 = vmatprep.subr.mxu0 %v296
        %1151 = vmatpush1.msra.mxu0 %v295
        %1152 = vmatprep.subr.mxu0 %v294
        %1153 = vmatpush1.msra.mxu0 %v293
        %1154 = vmatprep.subr.mxu0 %v292
        %1155 = vmatpush1.msra.mxu0 %v291
        %1156 = vmatprep.subr.mxu0 %v290
        %1157 = vmatpush1.msra.mxu0 %v289
        %1158 = vmatprep.subr.mxu0 %v288
        %1159 = vmatpush1.msra.mxu0 %v287
        %1160 = vmatprep.subr.mxu0 0.0
        %1161 = vmatpush2.msra.mxu0 0.0
        %1162 = vmatprep.subr.mxu0 0.0
        %1163 = vmatpush2.msra.mxu0 0.0
        %1164 = vmatprep.subr.mxu0 0.0
        %1165 = vmatpush2.msra.mxu0 0.0
        %1166 = vmatprep.subr.mxu0 0.0
        %1167 = vmatpush2.msra.mxu0 0.0
        %1168 = vmatprep.subr.mxu0 0.0
        %1169 = vmatpush2.msra.mxu0 0.0
        %1170 = vmatprep.subr.mxu0 0.0
        %1171 = vmatpush2.msra.mxu0 0.0
        %1172 = vmatprep.subr.mxu0 0.0
        %1173 = vmatpush2.msra.mxu0 0.0
        %1174 = vmatprep.subr.mxu0 0.0
        %1175 = vmatpush2.msra.mxu0 0.0
        %1176 = vmatprep.subr.mxu0 0.0
        %1177 = vmatpush2.msra.mxu0 0.0
        %1178 = vmatprep.subr.mxu0 0.0
        %1179 = vmatpush2.msra.mxu0 0.0
        %1180 = vmatprep.subr.mxu0 0.0
        %1181 = vmatpush2.msra.mxu0 0.0
        %1182 = vmatprep.subr.mxu0 0.0
        %1183 = vmatpush2.msra.mxu0 0.0
        %1184 = vmatprep.subr.mxu0 0.0
        %1185 = vmatpush2.msra.mxu0 0.0
        %1186 = vmatprep.subr.mxu0 0.0
        %1187 = vmatpush2.msra.mxu0 0.0
        %1188 = vmatprep.subr.mxu0 0.0
        %1189 = vmatpush2.msra.mxu0 0.0
        %1190 = vmatprep.subr.mxu0 0.0
        %1191 = vmatpush2.msra.mxu0 0.0
        %1192 = vmatprep.mubr.f32.mxu0 0.0
        %1193 = vmatmul.mubr.f32.gmra.mxu0 %v1126
        %v1194 = vpop.f32.mrf.mxu0
        %v1195 = vadd.f32 0.0, %v1194
        %v1196 = vpop.f32.mrf.mxu0
        %v1197 = vadd.f32 0.0, %v1196
        %1198 = vdwg.mxu0
        %v1200 = vrot.slane %v1195, 4
        %v1202 = vadd.f32 %v385, %v1200
        %v1203 = vadd.f32 %v1197, %v501
        %v1204 = vxor.u32 %v1202, 2147483648
        %v1205 = vmul.f32 %v1204, 1.442695
        %v1206 = vpow.pop %v1205
        %v1207 = vadd.f32 %v1206, 1.0
        %v1208 = vrcp.pop %v1207
        %v1209 = vmul.f32 1.0, %v1208
        %v1210 = vtanh.pop %v1202
        %v1212 = vrot.slane %v1083, 6
        %v1214 = vmul.f32 %v1209, %v1212
        %1216 = vrot.lane.b32.xlu0 %v1210, 64
        %v1217 = vpop.permute.xlu0 %1216
        %v1219 = vmul.f32 %v1209, %v1217
        %1221 = vrot.lane.b32.xlu0 %v1219, 32
        %v1222 = vpop.permute.xlu0 %1221
        %v1224 = vadd.f32 %v1214, %v1222
        %v1225 = vtanh.pop %v1224
        %1227 = vrot.lane.b32.xlu0 %v1225, 64
        %v1228 = vpop.permute.xlu0 %1227
        %v1230 = vmul.f32 %v1209, %v1228
        %v1231 = vxor.u32 %v1203, 2147483648
        %v1232 = vmul.f32 %v1231, 1.442695
        %v1233 = vpow.pop %v1232
        %v1234 = vadd.f32 %v1233, 1.0
        %v1235 = vrcp.pop %v1234
        %v1236 = vmul.f32 1.0, %v1235
        %v1237 = vtanh.pop %v1203
        %v1238 = vmul.f32 %v1236, %v1107
        %1240 = vrot.lane.b32.xlu0 %v1237, 64
        %v1241 = vpop.permute.xlu0 %1240
        %v1243 = vmul.f32 %v1236, %v1241
        %1245 = vrot.lane.b32.xlu0 %v1243, 32
        %v1246 = vpop.permute.xlu0 %1245
        %v1248 = vadd.f32 %v1238, %v1246
        %v1249 = vtanh.pop %v1248
        %1251 = vrot.lane.b32.xlu0 %v1249, 64
        %v1252 = vpop.permute.xlu0 %1251
        %v1254 = vmul.f32 %v1236, %v1252
        %1256 = vrot.lane.b32.xlu0 %v1230, 32
        %v1257 = vpop.permute.xlu0 %1256
        %v1260 = vrot.slane %v1254, 4
        %1261 = vrot.lane.b32.xlu0 %v1260, 64
        %v1262 = vpop.permute.xlu0 %1261
        %v1264 = vsel %vm416, %v1257, %v1262
        %v1266 = vrot.slane %v1264, 4
        %v1267 = vsel %vm418, %v1266, 0
        %1269 = vmatprep.subr.mxu0 0.0
        %1270 = vmatpush1.msra.mxu0 0.0
        %1271 = vmatprep.subr.mxu0 0.0
        %1272 = vmatpush1.msra.mxu0 0.0
        %1273 = vmatprep.subr.mxu0 0.0
        %1274 = vmatpush1.msra.mxu0 0.0
        %1275 = vmatprep.subr.mxu0 0.0
        %1276 = vmatpush1.msra.mxu0 0.0
        %1277 = vmatprep.subr.mxu0 0.0
        %1278 = vmatpush1.msra.mxu0 0.0
        %1279 = vmatprep.subr.mxu0 0.0
        %1280 = vmatpush1.msra.mxu0 0.0
        %1281 = vmatprep.subr.mxu0 0.0
        %1282 = vmatpush1.msra.mxu0 0.0
        %1283 = vmatprep.subr.mxu0 0.0
        %1284 = vmatpush1.msra.mxu0 0.0
        %1285 = vmatprep.subr.mxu0 %v302
        %1286 = vmatpush1.msra.mxu0 %v301
        %1287 = vmatprep.subr.mxu0 %v300
        %1288 = vmatpush1.msra.mxu0 %v299
        %1289 = vmatprep.subr.mxu0 %v298
        %1290 = vmatpush1.msra.mxu0 %v297
        %1291 = vmatprep.subr.mxu0 %v296
        %1292 = vmatpush1.msra.mxu0 %v295
        %1293 = vmatprep.subr.mxu0 %v294
        %1294 = vmatpush1.msra.mxu0 %v293
        %1295 = vmatprep.subr.mxu0 %v292
        %1296 = vmatpush1.msra.mxu0 %v291
        %1297 = vmatprep.subr.mxu0 %v290
        %1298 = vmatpush1.msra.mxu0 %v289
        %1299 = vmatprep.subr.mxu0 %v288
        %1300 = vmatpush1.msra.mxu0 %v287
        %1301 = vmatprep.subr.mxu0 0.0
        %1302 = vmatpush2.msra.mxu0 0.0
        %1303 = vmatprep.subr.mxu0 0.0
        %1304 = vmatpush2.msra.mxu0 0.0
        %1305 = vmatprep.subr.mxu0 0.0
        %1306 = vmatpush2.msra.mxu0 0.0
        %1307 = vmatprep.subr.mxu0 0.0
        %1308 = vmatpush2.msra.mxu0 0.0
        %1309 = vmatprep.subr.mxu0 0.0
        %1310 = vmatpush2.msra.mxu0 0.0
        %1311 = vmatprep.subr.mxu0 0.0
        %1312 = vmatpush2.msra.mxu0 0.0
        %1313 = vmatprep.subr.mxu0 0.0
        %1314 = vmatpush2.msra.mxu0 0.0
        %1315 = vmatprep.subr.mxu0 0.0
        %1316 = vmatpush2.msra.mxu0 0.0
        %1317 = vmatprep.subr.mxu0 0.0
        %1318 = vmatpush2.msra.mxu0 0.0
        %1319 = vmatprep.subr.mxu0 0.0
        %1320 = vmatpush2.msra.mxu0 0.0
        %1321 = vmatprep.subr.mxu0 0.0
        %1322 = vmatpush2.msra.mxu0 0.0
        %1323 = vmatprep.subr.mxu0 0.0
        %1324 = vmatpush2.msra.mxu0 0.0
        %1325 = vmatprep.subr.mxu0 0.0
        %1326 = vmatpush2.msra.mxu0 0.0
        %1327 = vmatprep.subr.mxu0 0.0
        %1328 = vmatpush2.msra.mxu0 0.0
        %1329 = vmatprep.subr.mxu0 0.0
        %1330 = vmatpush2.msra.mxu0 0.0
        %1331 = vmatprep.subr.mxu0 0.0
        %1332 = vmatpush2.msra.mxu0 0.0
        %1333 = vmatprep.mubr.f32.mxu0 0.0
        %1334 = vmatmul.mubr.f32.gmra.mxu0 %v1267
        %v1335 = vpop.f32.mrf.mxu0
        %v1336 = vadd.f32 0.0, %v1335
        %v1337 = vpop.f32.mrf.mxu0
        %v1338 = vadd.f32 0.0, %v1337
        %1339 = vdwg.mxu0
        %v1341 = vrot.slane %v1336, 2
        %v1343 = vadd.f32 %v385, %v1341
        %v1344 = vadd.f32 %v1338, %v501
        %v1345 = vxor.u32 %v1343, 2147483648
        %v1346 = vmul.f32 %v1345, 1.442695
        %v1347 = vpow.pop %v1346
        %v1348 = vadd.f32 %v1347, 1.0
        %v1349 = vrcp.pop %v1348
        %v1350 = vmul.f32 1.0, %v1349
        %v1351 = vtanh.pop %v1343
        %v1353 = vrot.slane %v1224, 6
        %v1355 = vmul.f32 %v1350, %v1353
        %1357 = vrot.lane.b32.xlu0 %v1351, 64
        %v1358 = vpop.permute.xlu0 %1357
        %v1360 = vmul.f32 %v1350, %v1358
        %1362 = vrot.lane.b32.xlu0 %v1360, 32
        %v1363 = vpop.permute.xlu0 %1362
        %v1365 = vadd.f32 %v1355, %v1363
        %v1366 = vtanh.pop %v1365
        %1368 = vrot.lane.b32.xlu0 %v1366, 64
        %v1369 = vpop.permute.xlu0 %1368
        %v1371 = vmul.f32 %v1350, %v1369
        %v1372 = vxor.u32 %v1344, 2147483648
        %v1373 = vmul.f32 %v1372, 1.442695
        %v1374 = vpow.pop %v1373
        %v1375 = vadd.f32 %v1374, 1.0
        %v1376 = vrcp.pop %v1375
        %v1377 = vmul.f32 1.0, %v1376
        %v1378 = vtanh.pop %v1344
        %v1379 = vmul.f32 %v1377, %v1248
        %1381 = vrot.lane.b32.xlu0 %v1378, 64
        %v1382 = vpop.permute.xlu0 %1381
        %v1384 = vmul.f32 %v1377, %v1382
        %1386 = vrot.lane.b32.xlu0 %v1384, 32
        %v1387 = vpop.permute.xlu0 %1386
        %v1389 = vadd.f32 %v1379, %v1387
        %v1390 = vtanh.pop %v1389
        %1392 = vrot.lane.b32.xlu0 %v1390, 64
        %v1393 = vpop.permute.xlu0 %1392
        %v1395 = vmul.f32 %v1377, %v1393
        %1397 = vrot.lane.b32.xlu0 %v1371, 32
        %v1398 = vpop.permute.xlu0 %1397
        %v1401 = vrot.slane %v1395, 2
        %1402 = vrot.lane.b32.xlu0 %v1401, 64
        %v1403 = vpop.permute.xlu0 %1402
        %v1405 = vsel %vm416, %v1398, %v1403
        %v1407 = vrot.slane %v1405, 6
        %v1408 = vsel %vm418, %v1407, 0
        %1410 = vmatprep.subr.mxu0 0.0
        %1411 = vmatpush1.msra.mxu0 0.0
        %1412 = vmatprep.subr.mxu0 0.0
        %1413 = vmatpush1.msra.mxu0 0.0
        %1414 = vmatprep.subr.mxu0 0.0
        %1415 = vmatpush1.msra.mxu0 0.0
        %1416 = vmatprep.subr.mxu0 0.0
        %1417 = vmatpush1.msra.mxu0 0.0
        %1418 = vmatprep.subr.mxu0 0.0
        %1419 = vmatpush1.msra.mxu0 0.0
        %1420 = vmatprep.subr.mxu0 0.0
        %1421 = vmatpush1.msra.mxu0 0.0
        %1422 = vmatprep.subr.mxu0 0.0
        %1423 = vmatpush1.msra.mxu0 0.0
        %1424 = vmatprep.subr.mxu0 0.0
        %1425 = vmatpush1.msra.mxu0 0.0
        %1426 = vmatprep.subr.mxu0 0.0
        %1427 = vmatpush1.msra.mxu0 %v302
        %1428 = vmatprep.subr.mxu0 0.0
        %1429 = vmatpush1.msra.mxu0 %v300
        %1430 = vmatprep.subr.mxu0 0.0
        %1431 = vmatpush1.msra.mxu0 %v298
        %1432 = vmatprep.subr.mxu0 0.0
        %1433 = vmatpush1.msra.mxu0 %v296
        %1434 = vmatprep.subr.mxu0 0.0
        %1435 = vmatpush1.msra.mxu0 %v294
        %1436 = vmatprep.subr.mxu0 0.0
        %1437 = vmatpush1.msra.mxu0 %v292
        %1438 = vmatprep.subr.mxu0 0.0
        %1439 = vmatpush1.msra.mxu0 %v290
        %1440 = vmatprep.subr.mxu0 0.0
        %1441 = vmatpush1.msra.mxu0 %v288
        %1442 = vmatprep.subr.mxu0 0.0
        %1443 = vmatpush2.msra.mxu0 0.0
        %1444 = vmatprep.subr.mxu0 0.0
        %1445 = vmatpush2.msra.mxu0 0.0
        %1446 = vmatprep.subr.mxu0 0.0
        %1447 = vmatpush2.msra.mxu0 0.0
        %1448 = vmatprep.subr.mxu0 0.0
        %1449 = vmatpush2.msra.mxu0 0.0
        %1450 = vmatprep.subr.mxu0 0.0
        %1451 = vmatpush2.msra.mxu0 0.0
        %1452 = vmatprep.subr.mxu0 0.0
        %1453 = vmatpush2.msra.mxu0 0.0
        %1454 = vmatprep.subr.mxu0 0.0
        %1455 = vmatpush2.msra.mxu0 0.0
        %1456 = vmatprep.subr.mxu0 0.0
        %1457 = vmatpush2.msra.mxu0 0.0
        %1458 = vmatprep.subr.mxu0 0.0
        %1459 = vmatpush2.msra.mxu0 0.0
        %1460 = vmatprep.subr.mxu0 0.0
        %1461 = vmatpush2.msra.mxu0 0.0
        %1462 = vmatprep.subr.mxu0 0.0
        %1463 = vmatpush2.msra.mxu0 0.0
        %1464 = vmatprep.subr.mxu0 0.0
        %1465 = vmatpush2.msra.mxu0 0.0
        %1466 = vmatprep.subr.mxu0 0.0
        %1467 = vmatpush2.msra.mxu0 0.0
        %1468 = vmatprep.subr.mxu0 0.0
        %1469 = vmatpush2.msra.mxu0 0.0
        %1470 = vmatprep.subr.mxu0 0.0
        %1471 = vmatpush2.msra.mxu0 0.0
        %1472 = vmatprep.subr.mxu0 0.0
        %1473 = vmatpush2.msra.mxu0 0.0
        %1474 = vmatprep.mubr.f32.mxu0 0.0
        %1475 = vmatmul.mubr.f32.gmra.mxu0 %v1408
        %v1476 = vpop.f32.mrf.mxu0
        %v1477 = vadd.f32 %v501, %v1476
        %v1478 = vpop.f32.mrf.mxu0
        %1479 = vdwg.mxu0
        %v1480 = vxor.u32 %v1477, 2147483648
        %v1481 = vmul.f32 %v1480, 1.442695
        %v1482 = vpow.pop %v1481
        %v1483 = vadd.f32 %v1482, 1.0
        %v1484 = vrcp.pop %v1483
        %v1485 = vmul.f32 1.0, %v1484
        %v1486 = vtanh.pop %v1477
        %v1487 = vmul.f32 %v1485, %v1389
        %1489 = vrot.lane.b32.xlu0 %v1486, 64
        %v1490 = vpop.permute.xlu0 %1489
        %v1492 = vmul.f32 %v1485, %v1490
        %1494 = vrot.lane.b32.xlu0 %v1492, 32
        %v1495 = vpop.permute.xlu0 %1494
        %v1497 = vadd.f32 %v1487, %v1495
        %v1498 = vtanh.pop %v1497
        %1500 = vrot.lane.b32.xlu0 %v1498, 64
        %v1501 = vpop.permute.xlu0 %1500
        %v1503 = vmul.f32 %v1485, %v1501
        %v1505 = vrot.slane %v1503, 2
        %1506 = vrot.lane.b32.xlu0 %v1505, 64
        %v1507 = vpop.permute.xlu0 %1506
        %v1509 = vsel %vm416, %v1398, %v1507
        %v1510 = vld [vmem:[%s4] sm:$0xff]
        %v1511 = vld [vmem:[%s4 + $0x8] sm:$0xff]
        %v1512 = vld [vmem:[%s4 + $0x10] sm:$0xff]
        %v1513 = vld [vmem:[%s4 + $0x18] sm:$0xff]
        %v1514 = vld [vmem:[%s4 + $0x20] sm:$0xff]
        %v1515 = vld [vmem:[%s4 + $0x28] sm:$0xff]
        %v1516 = vld [vmem:[%s4 + $0x30] sm:$0xff]
        %v1517 = vld [vmem:[%s4 + $0x38] sm:$0xff]
        %v1518 = vld [vmem:[%s5] sm:$0x1]
        %v1520 = vlaneseq
        %v1521 = vshrl.u32 %v1520, 7
        %v1522 = vsub.s32 0, %v1521
        %v1523 = vrot.slane %v1518, %v1522
        %v1526 = vrot.slane %v1509, 6
        %v1527 = vsel %vm418, %v1526, 0
        %1529 = vmatprep.subr.mxu0 0.0
        %1530 = vmatpush1.msra.mxu0 0.0
        %1531 = vmatprep.subr.mxu0 0.0
        %1532 = vmatpush1.msra.mxu0 0.0
        %1533 = vmatprep.subr.mxu0 0.0
        %1534 = vmatpush1.msra.mxu0 0.0
        %1535 = vmatprep.subr.mxu0 0.0
        %1536 = vmatpush1.msra.mxu0 0.0
        %1537 = vmatprep.subr.mxu0 0.0
        %1538 = vmatpush1.msra.mxu0 0.0
        %1539 = vmatprep.subr.mxu0 0.0
        %1540 = vmatpush1.msra.mxu0 0.0
        %1541 = vmatprep.subr.mxu0 0.0
        %1542 = vmatpush1.msra.mxu0 0.0
        %1543 = vmatprep.subr.mxu0 0.0
        %1544 = vmatpush1.msra.mxu0 0.0
        %1545 = vmatprep.subr.mxu0 0.0
        %1546 = vmatpush1.msra.mxu0 %v1517
        %1547 = vmatprep.subr.mxu0 0.0
        %1548 = vmatpush1.msra.mxu0 %v1516
        %1549 = vmatprep.subr.mxu0 0.0
        %1550 = vmatpush1.msra.mxu0 %v1515
        %1551 = vmatprep.subr.mxu0 0.0
        %1552 = vmatpush1.msra.mxu0 %v1514
        %1553 = vmatprep.subr.mxu0 0.0
        %1554 = vmatpush1.msra.mxu0 %v1513
        %1555 = vmatprep.subr.mxu0 0.0
        %1556 = vmatpush1.msra.mxu0 %v1512
        %1557 = vmatprep.subr.mxu0 0.0
        %1558 = vmatpush1.msra.mxu0 %v1511
        %1559 = vmatprep.subr.mxu0 0.0
        %1560 = vmatpush1.msra.mxu0 %v1510
        %1561 = vmatprep.subr.mxu0 0.0
        %1562 = vmatpush2.msra.mxu0 0.0
        %1563 = vmatprep.subr.mxu0 0.0
        %1564 = vmatpush2.msra.mxu0 0.0
        %1565 = vmatprep.subr.mxu0 0.0
        %1566 = vmatpush2.msra.mxu0 0.0
        %1567 = vmatprep.subr.mxu0 0.0
        %1568 = vmatpush2.msra.mxu0 0.0
        %1569 = vmatprep.subr.mxu0 0.0
        %1570 = vmatpush2.msra.mxu0 0.0
        %1571 = vmatprep.subr.mxu0 0.0
        %1572 = vmatpush2.msra.mxu0 0.0
        %1573 = vmatprep.subr.mxu0 0.0
        %1574 = vmatpush2.msra.mxu0 0.0
        %1575 = vmatprep.subr.mxu0 0.0
        %1576 = vmatpush2.msra.mxu0 0.0
        %1577 = vmatprep.subr.mxu0 0.0
        %1578 = vmatpush2.msra.mxu0 0.0
        %1579 = vmatprep.subr.mxu0 0.0
        %1580 = vmatpush2.msra.mxu0 0.0
        %1581 = vmatprep.subr.mxu0 0.0
        %1582 = vmatpush2.msra.mxu0 0.0
        %1583 = vmatprep.subr.mxu0 0.0
        %1584 = vmatpush2.msra.mxu0 0.0
        %1585 = vmatprep.subr.mxu0 0.0
        %1586 = vmatpush2.msra.mxu0 0.0
        %1587 = vmatprep.subr.mxu0 0.0
        %1588 = vmatpush2.msra.mxu0 0.0
        %1589 = vmatprep.subr.mxu0 0.0
        %1590 = vmatpush2.msra.mxu0 0.0
        %1591 = vmatprep.subr.mxu0 0.0
        %1592 = vmatpush2.msra.mxu0 0.0
        %1593 = vmatprep.mubr.f32.mxu0 0.0
        %1594 = vmatmul.mubr.f32.gmra.mxu0 %v1527
        %v1595 = vpop.f32.mrf.mxu0
        %v1596 = vadd.f32 %v1523, %v1595
        %v1597 = vpop.f32.mrf.mxu0
        %1598 = vdwg.mxu0
        %vm1599 = vcmask 58368
        %1600 = vst.msk [vmem:[%s284] sm:$0x3] %vm1599, %v1596
        %s1601 = sand.u32 %s163, 1
        %s1602 = scalar_lea.sflag [#allocation4], %s1601
        %s1603 = sand.u32 %s163, 1
        %s1604 = smul.addr %s1603, 2
        %s1605 = scalar_lea.vmem [#allocation7], %s1604
        // Predicated region
        $region53: #{tpu_custom_call.1} parent=43 // pred_check
          %p1606 = pneg %p173
        $region54: #{tpu_custom_call.1} parent=43 // pred_check_branch
          %1608 = sbr.rel (%p1606) target = $region56
        $region55: #{tpu_custom_call.1} parent=43 // pred_region
          %s1610 = ssub.s32 32, 32
          %1611 = vsyncadd %s1602, %s1610
          %s1612 = smul.addr %s24, 32
          %s1613 = scalar_lea.hbm %s6, %s1612
          %s1615 = sshll.u32 %s1605, 4
          %s1616 = int_to_ptr.vmem [resolvable:$true] %s1615
          %1618 = dma.vmem_to_hbm [thread:$0]  %s1616, 32, %s1613, %s1602
        $region56: #{tpu_custom_call.1} parent=43 // pred_fallthru
          _
      $region44: #{tpu_custom_call.1} parent=5 // pred_fallthru
        _
      %p1619 = scmp.le.s32.totalorder 2, %s19
      // Predicated region
      $region57: #{tpu_custom_call.1} parent=5 // pred_check
        %p1620 = pneg %p1619
      $region58: #{tpu_custom_call.1} parent=5 // pred_check_branch
        %1622 = sbr.rel (%p1620) target = $region60
      $region59: #{tpu_custom_call.1} parent=5 // pred_region
        %s1623 = ssub.s32 %s19, 2
        // Predicated region
        $region61: #{tpu_custom_call.1} parent=59 // pred_check
          %p1624 = pneg %p179
        $region62: #{tpu_custom_call.1} parent=59 // pred_check_branch
          %1626 = sbr.rel (%p1624) target = $region64
        $region63: #{tpu_custom_call.1} parent=59 // pred_region
          %s1627 = sand.u32 %s164, 1
          %s1628 = scalar_lea.sflag [#allocation4], %s1627
          %s1629 = sand.u32 %s164, 1
          %s1630 = smul.addr %s1629, 2
          %s1631 = scalar_lea.vmem [#allocation7], %s1630
          %1632 = dma.done %s1628, 32
        $region64: #{tpu_custom_call.1} parent=59 // pred_fallthru
          _
      $region60: #{tpu_custom_call.1} parent=5 // pred_fallthru
        _
    $region6: #{tpu_custom_call.1} parent=1 // loop_footer
      %s23 = sadd.s32 1, %s19
    $region7: #{tpu_custom_call.1} parent=1 // loop_footer_branch
      %18 = sbr.rel target = $region3
    $region8: #{tpu_custom_call.1} parent=1 // loop_exit
      _
    %1633 = vsyncpa [#allocation3], 1
    %s1634 = scalar_lea.sflag [#allocation3], 1
    %1635 = vsyncpa %s1634, 1
    %1636 = vsyncpa [#allocation6], 1
    %1637 = vsyncpa [#allocation4], 1
    %s1638 = scalar_lea.sflag [#allocation4], 1
    %1639 = vsyncpa %s1638, 1

</llo_original>
